<compile_context>
chip_gen: v7x
topology: tpu7x:2x2x1
jax: 0.10.0
libtpu: 0.0.40
codegen_flags: <defaults>
</compile_context>

<pallas_src>
import functools
import math

import jax
import jax.numpy as jnp
from jax import lax
from jax.experimental import pallas as pl
from jax.experimental.pallas import tpu as pltpu


_VMEM_SPEC = pl.BlockSpec(memory_space=pltpu.MemorySpace.VMEM)


# ---------------------------------------------------------------------------
# In-kernel helpers
# ---------------------------------------------------------------------------
def _erf(z):
    """Abramowitz & Stegun 7.1.26 erf approximation (|err| < 1.5e-7).

    Uses only exp / mul / add / div / select so it lowers on all TPU
    generations (does not rely on an erf primitive in Mosaic).
    """
    a1, a2, a3, a4, a5 = (0.254829592, -0.284496736, 1.421413741,
                          -1.453152027, 1.061405429)
    p = 0.3275911
    neg = z < 0.0
    az = jnp.where(neg, -z, z)
    t = 1.0 / (1.0 + p * az)
    poly = ((((a5 * t + a4) * t + a3) * t + a2) * t + a1) * t
    y = 1.0 - poly * jnp.exp(-az * az)
    return jnp.where(neg, -y, y)


def _gelu_exact(x):
    # nn.GELU() default = exact erf formulation.
    return 0.5 * x * (1.0 + _erf(x * (1.0 / math.sqrt(2.0))))


def _layer_norm(x, gamma, beta, eps):
    mu = jnp.mean(x, axis=-1, keepdims=True)
    d = x - mu
    var = jnp.mean(d * d, axis=-1, keepdims=True)
    return d * lax.rsqrt(var + eps) * gamma + beta


# ---------------------------------------------------------------------------
# Pallas kernels
# ---------------------------------------------------------------------------
def _qkv_kernel(x_ref, w_ref, b_ref, o_ref):
    o_ref[...] = (jnp.dot(x_ref[...], w_ref[...],
                          preferred_element_type=jnp.float32)
                  + b_ref[...]).astype(o_ref.dtype)


def _attention_kernel(q_ref, k_ref, v_ref, o_ref, *, scale):
    q = q_ref[...]
    k = k_ref[...]
    v = v_ref[...]
    s = jnp.einsum("bqd,bkd->bqk", q, k,
                   preferred_element_type=jnp.float32) * scale
    s = s - jnp.max(s, axis=-1, keepdims=True)      # stable softmax (== torch)
    p = jnp.exp(s)
    p = p / jnp.sum(p, axis=-1, keepdims=True)
    o_ref[...] = jnp.einsum("bqk,bkd->bqd", p, v,
                            preferred_element_type=jnp.float32
                            ).astype(o_ref.dtype)


def _encoder_tail_kernel(vals_ref, x_ref, wo_ref, bo_ref, g1_ref, b1_ref,
                         w1_ref, bf1_ref, w2_ref, bf2_ref, g2_ref, b2_ref,
                         o_ref, *, eps):
    x = x_ref[...]
    attn = (jnp.dot(vals_ref[...], wo_ref[...],
                    preferred_element_type=jnp.float32) + bo_ref[...])
    # x = LayerNorm1(x + MultiheadAttention(x))
    h = _layer_norm(x + attn, g1_ref[...], b1_ref[...], eps)
    # feedForward: Linear -> GELU -> Dropout1d(identity, eval) -> Linear
    f = (jnp.dot(h, w1_ref[...], preferred_element_type=jnp.float32)
         + bf1_ref[...])
    f = _gelu_exact(f)
    f = (jnp.dot(f, w2_ref[...], preferred_element_type=jnp.float32)
         + bf2_ref[...])
    # return x + LayerNorm2(feedForward(x))
    f = _layer_norm(f, g2_ref[...], b2_ref[...], eps)
    o_ref[...] = (h + f).astype(o_ref.dtype)


# ---------------------------------------------------------------------------
# Forward pass (3 fused pallas_calls + free reshape glue)
# ---------------------------------------------------------------------------
def encoder_forward(x, params, *, heads):
    """x: (B, S, D) float32.  Reproduces Encoder.forward() (eval mode)."""
    B, S, D = x.shape
    dh = D // heads
    x2d = x.reshape(B * S, D).astype(jnp.float32)

    # ---- 1) fused QKV projection ------------------------------------------
    wqkv, bqkv = params["qkv"]                         # torch layout (3D, D)
    qkv = pl.pallas_call(
        _qkv_kernel,
        out_shape=jax.ShapeDtypeStruct((B * S, 3 * D), jnp.float32),
        in_specs=[_VMEM_SPEC] * 3,
        out_specs=_VMEM_SPEC,
    )(x2d, wqkv.T, bqkv.reshape(1, 3 * D))

    # torch: qkv.reshape(-1, heads, S, 3*dh) then chunk(3, dim=-1).
    # Row-major reshape == jnp.reshape; done as free metadata glue here.
    qkv4 = qkv.reshape(B, heads, S, 3 * dh)
    q = qkv4[..., 0 * dh:1 * dh].reshape(B * heads, S, dh)
    k = qkv4[..., 1 * dh:2 * dh].reshape(B * heads, S, dh)
    v = qkv4[..., 2 * dh:3 * dh].reshape(B * heads, S, dh)

    # ---- 2) attention core (scores + softmax + weighted sum) ---------------
    vals = pl.pallas_call(
        functools.partial(_attention_kernel, scale=1.0 / math.sqrt(dh)),
        out_shape=jax.ShapeDtypeStruct((B * heads, S, dh), jnp.float32),
        in_specs=[_VMEM_SPEC] * 3,
        out_specs=_VMEM_SPEC,
    )(q, k, v)

    # torch: values.reshape(-1, S, D) — again an exact row-major reshape.
    vals2d = vals.reshape(B * S, D)

    # ---- 3) out-proj + residual + LN1 + FFN(GELU) + LN2 + residual ---------
    wo, bo = params["attn_out"]
    g1, b1 = params["ln1"]
    w1, bf1 = params["ff1"]
    w2, bf2 = params["ff2"]
    g2, b2 = params["ln2"]
    out = pl.pallas_call(
        functools.partial(_encoder_tail_kernel, eps=1e-5),
        out_shape=jax.ShapeDtypeStruct((B * S, D), jnp.float32),
        in_specs=[_VMEM_SPEC] * 12,
        out_specs=_VMEM_SPEC,
    )(vals2d, x2d, wo.T, bo.reshape(1, D), g1.reshape(1, D), b1.reshape(1, D),
      w1.T, bf1.reshape(1, D), w2.T, bf2.reshape(1, D),
      g2.reshape(1, D), b2.reshape(1, D))
    return out.reshape(B, S, D)


# ---------------------------------------------------------------------------
# Pure-JAX reference (same math, no Pallas) for a correctness cross-check
# ---------------------------------------------------------------------------
def _ref_layer_norm(x, g, b, eps=1e-5):
    mu = x.mean(-1, keepdims=True)
    var = ((x - mu) ** 2).mean(-1, keepdims=True)
    return (x - mu) * lax.rsqrt(var + eps) * g + b


def encoder_reference(x, params, *, heads):
    B, S, D = x.shape
    dh = D // heads
    wqkv, bqkv = params["qkv"]
    qkv = x @ wqkv.T + bqkv
    qkv = qkv.reshape(B, heads, S, 3 * dh)
    q, k, v = qkv[..., :dh], qkv[..., dh:2 * dh], qkv[..., 2 * dh:]
    s = (q @ jnp.swapaxes(k, -1, -2)) / math.sqrt(dh)
    p = jax.nn.softmax(s, axis=-1)
    vals = (p @ v).reshape(B, S, D)
    wo, bo = params["attn_out"]
    g1, b1 = params["ln1"]
    h = _ref_layer_norm(x + vals @ wo.T + bo, g1, b1)
    w1, bf1 = params["ff1"]
    w2, bf2 = params["ff2"]
    f = jax.nn.gelu(h @ w1.T + bf1, approximate=False)
    f = f @ w2.T + bf2
    g2, b2 = params["ln2"]
    return h + _ref_layer_norm(f, g2, b2)


# ---------------------------------------------------------------------------
# Deterministic parameter initialization (PyTorch shapes/layouts)
# ---------------------------------------------------------------------------
def _uniform(key, shape, bound):
    return jax.random.uniform(key, shape, jnp.float32, -bound, bound)


def init_linear(key, out_f, in_f):
    k1, k2 = jax.random.split(key)
    bound = 1.0 / math.sqrt(in_f)
    return _uniform(k1, (out_f, in_f), bound), _uniform(k2, (out_f,), bound)


def init_layernorm(key, d):
    # nn.LayerNorm default is (ones, zeros); perturb slightly so the affine
    # path is actually exercised by the test.
    k1, k2 = jax.random.split(key)
    gamma = 1.0 + 0.05 * jax.random.normal(k1, (d,), jnp.float32)
    beta = 0.05 * jax.random.normal(k2, (d,), jnp.float32)
    return gamma, beta


def init_params(key, dim):
    ks = jax.random.split(key, 6)
    return dict(
        qkv=init_linear(ks[0], 3 * dim, dim),
        attn_out=init_linear(ks[1], dim, dim),
        ln1=init_layernorm(ks[2], dim),
        ff1=init_linear(ks[3], dim, dim),
        ff2=init_linear(ks[4], dim, dim),
        ln2=init_layernorm(ks[5], dim),
    )


if __name__ == "__main__":
    HEADS, SEQ, DIM, BATCH = 4, 16, 128, 2    # Encoder(heads=4, seq=16, dim=128)

    key = jax.random.PRNGKey(0)
    pkey, xkey = jax.random.split(key)
    params = init_params(pkey, DIM)
    x = jax.random.normal(xkey, (BATCH, SEQ, DIM), jnp.float32)

    fwd = jax.jit(functools.partial(encoder_forward, heads=HEADS))
    out = fwd(x, params)
    jax.block_until_ready(out)
    assert out.shape == (BATCH, SEQ, DIM), out.shape

    # Cross-check against a pure-JAX reference of the same module (loose
    # tolerance allows for MXU vs XLA matmul precision differences).
    ref = encoder_reference(x, params, heads=HEADS)
    err = float(jnp.max(jnp.abs(out - ref)))
    assert err < 5e-2, f"max abs err vs reference: {err}"

    print("KERNEL_OK")
</pallas_src>

<mosaic_0001>
module attributes {stable_mosaic.version = 11 : i64} {
  func.func @_qkv_kernel(%arg0: memref<32x128xf32, #tpu.memory_space<vmem>>, %arg1: memref<128x384xf32, #tpu.memory_space<vmem>>, %arg2: memref<1x384xf32, #tpu.memory_space<vmem>>, %arg3: memref<32x384xf32, #tpu.memory_space<vmem>>) attributes {dimension_semantics = [], scalar_prefetch = 0 : i64, scratch_operands = 0 : i64, tpu.core_type = #tpu.core_type<tc>} {
    %c0 = arith.constant 0 : index
    %c0_0 = arith.constant 0 : index
    %0 = vector.load %arg0[%c0, %c0_0] : memref<32x128xf32, #tpu.memory_space<vmem>>, vector<32x128xf32>
    %c0_1 = arith.constant 0 : index
    %c0_2 = arith.constant 0 : index
    %1 = vector.load %arg1[%c0_1, %c0_2] : memref<128x384xf32, #tpu.memory_space<vmem>>, vector<128x384xf32>
    %cst = arith.constant dense<0.000000e+00> : vector<32x384xf32>
    %2 = tpu.matmul %0, %1, %cst {dimension_numbers = #tpu.dot_dimension_numbers<[1], [0], [0], [1], [0, 0, 1, 1], [], []>} : vector<32x128xf32>, vector<128x384xf32>, vector<32x384xf32> -> vector<32x384xf32>
    %c0_3 = arith.constant 0 : index
    %c0_4 = arith.constant 0 : index
    %3 = vector.load %arg2[%c0_3, %c0_4] : memref<1x384xf32, #tpu.memory_space<vmem>>, vector<1x384xf32>
    %4 = vector.broadcast %3 : vector<1x384xf32> to vector<32x384xf32>
    %5 = arith.addf %2, %4 : vector<32x384xf32>
    %c0_5 = arith.constant 0 : index
    %c0_6 = arith.constant 0 : index
    %6 = vector.load %arg3[%c0_5, %c0_6] : memref<32x384xf32, #tpu.memory_space<vmem>>, vector<32x384xf32>
    tpu.vector_store %arg3[%c0_5, %c0_6], %5 {strides = array<i32>} : memref<32x384xf32, #tpu.memory_space<vmem>>, vector<32x384xf32>,
    return
  }
}

module attributes {stable_mosaic.version = 11 : i64} {
  func.func @_attention_kernel(%arg0: memref<8x16x32xf32, #tpu.memory_space<vmem>>, %arg1: memref<8x16x32xf32, #tpu.memory_space<vmem>>, %arg2: memref<8x16x32xf32, #tpu.memory_space<vmem>>, %arg3: memref<8x16x32xf32, #tpu.memory_space<vmem>>) attributes {dimension_semantics = [], scalar_prefetch = 0 : i64, scratch_operands = 0 : i64, tpu.core_type = #tpu.core_type<tc>} {
    %c0 = arith.constant 0 : index
    %c0_0 = arith.constant 0 : index
    %c0_1 = arith.constant 0 : index
    %0 = vector.load %arg0[%c0, %c0_0, %c0_1] : memref<8x16x32xf32, #tpu.memory_space<vmem>>, vector<8x16x32xf32>
    %c0_2 = arith.constant 0 : index
    %c0_3 = arith.constant 0 : index
    %c0_4 = arith.constant 0 : index
    %1 = vector.load %arg1[%c0_2, %c0_3, %c0_4] : memref<8x16x32xf32, #tpu.memory_space<vmem>>, vector<8x16x32xf32>
    %c0_5 = arith.constant 0 : index
    %c0_6 = arith.constant 0 : index
    %c0_7 = arith.constant 0 : index
    %2 = vector.load %arg2[%c0_5, %c0_6, %c0_7] : memref<8x16x32xf32, #tpu.memory_space<vmem>>, vector<8x16x32xf32>
    "tpu.trace_start"() <{level = 10 : i32, message = "bqd,bkd->bqk"}> : () -> ()
    %cst = arith.constant dense<0.000000e+00> : vector<8x16x16xf32>
    %3 = tpu.matmul %0, %1, %cst {dimension_numbers = #tpu.dot_dimension_numbers<[2], [2], [1], [1], [0, 0, 0, 1, 1, 1], [0], [0]>} : vector<8x16x32xf32>, vector<8x16x32xf32>, vector<8x16x16xf32> -> vector<8x16x16xf32>
    "tpu.trace_stop"() : () -> ()
    %cst_8 = arith.constant 0.176776692 : f32
    %4 = vector.broadcast %cst_8 : f32 to vector<8x16x16xf32>
    %5 = arith.mulf %3, %4 : vector<8x16x16xf32>
    %cst_9 = arith.constant dense<0xFF800000> : vector<8x16xf32>
    %6 = vector.multi_reduction <maximumf>, %5, %cst_9 [2] : vector<8x16x16xf32> to vector<8x16xf32>
    %7 = vector.shape_cast %6 : vector<8x16xf32> to vector<8x16x1xf32>
    %8 = vector.broadcast %7 : vector<8x16x1xf32> to vector<8x16x16xf32>
    %9 = arith.subf %5, %8 : vector<8x16x16xf32>
    %10 = math.exp %9 : vector<8x16x16xf32>
    %cst_10 = arith.constant dense<0.000000e+00> : vector<8x16xf32>
    %11 = vector.multi_reduction <add>, %10, %cst_10 [2] : vector<8x16x16xf32> to vector<8x16xf32>
    %12 = vector.shape_cast %11 : vector<8x16xf32> to vector<8x16x1xf32>
    %13 = vector.broadcast %12 : vector<8x16x1xf32> to vector<8x16x16xf32>
    %14 = arith.divf %10, %13 : vector<8x16x16xf32>
    "tpu.trace_start"() <{level = 10 : i32, message = "bqk,bkd->bqd"}> : () -> ()
    %cst_11 = arith.constant dense<0.000000e+00> : vector<8x16x32xf32>
    %15 = tpu.matmul %14, %2, %cst_11 {dimension_numbers = #tpu.dot_dimension_numbers<[2], [1], [1], [2], [0, 0, 0, 1, 1, 2], [0], [0]>} : vector<8x16x16xf32>, vector<8x16x32xf32>, vector<8x16x32xf32> -> vector<8x16x32xf32>
    "tpu.trace_stop"() : () -> ()
    %c0_12 = arith.constant 0 : index
    %c0_13 = arith.constant 0 : index
    %c0_14 = arith.constant 0 : index
    %16 = vector.load %arg3[%c0_12, %c0_13, %c0_14] : memref<8x16x32xf32, #tpu.memory_space<vmem>>, vector<8x16x32xf32>
    tpu.vector_store %arg3[%c0_12, %c0_13, %c0_14], %15 {strides = array<i32>} : memref<8x16x32xf32, #tpu.memory_space<vmem>>, vector<8x16x32xf32>,
    return
  }
}

module attributes {stable_mosaic.version = 11 : i64} {
  func.func @_encoder_tail_kernel(%arg0: memref<32x128xf32, #tpu.memory_space<vmem>>, %arg1: memref<32x128xf32, #tpu.memory_space<vmem>>, %arg2: memref<128x128xf32, #tpu.memory_space<vmem>>, %arg3: memref<1x128xf32, #tpu.memory_space<vmem>>, %arg4: memref<1x128xf32, #tpu.memory_space<vmem>>, %arg5: memref<1x128xf32, #tpu.memory_space<vmem>>, %arg6: memref<128x128xf32, #tpu.memory_space<vmem>>, %arg7: memref<1x128xf32, #tpu.memory_space<vmem>>, %arg8: memref<128x128xf32, #tpu.memory_space<vmem>>, %arg9: memref<1x128xf32, #tpu.memory_space<vmem>>, %arg10: memref<1x128xf32, #tpu.memory_space<vmem>>, %arg11: memref<1x128xf32, #tpu.memory_space<vmem>>, %arg12: memref<32x128xf32, #tpu.memory_space<vmem>>) attributes {dimension_semantics = [], scalar_prefetch = 0 : i64, scratch_operands = 0 : i64, tpu.core_type = #tpu.core_type<tc>} {
    %c0 = arith.constant 0 : index
    %c0_0 = arith.constant 0 : index
    %0 = vector.load %arg1[%c0, %c0_0] : memref<32x128xf32, #tpu.memory_space<vmem>>, vector<32x128xf32>
    %c0_1 = arith.constant 0 : index
    %c0_2 = arith.constant 0 : index
    %1 = vector.load %arg0[%c0_1, %c0_2] : memref<32x128xf32, #tpu.memory_space<vmem>>, vector<32x128xf32>
    %c0_3 = arith.constant 0 : index
    %c0_4 = arith.constant 0 : index
    %2 = vector.load %arg2[%c0_3, %c0_4] : memref<128x128xf32, #tpu.memory_space<vmem>>, vector<128x128xf32>
    %cst = arith.constant dense<0.000000e+00> : vector<32x128xf32>
    %3 = tpu.matmul %1, %2, %cst {dimension_numbers = #tpu.dot_dimension_numbers<[1], [0], [0], [1], [0, 0, 1, 1], [], []>} : vector<32x128xf32>, vector<128x128xf32>, vector<32x128xf32> -> vector<32x128xf32>
    %c0_5 = arith.constant 0 : index
    %c0_6 = arith.constant 0 : index
    %4 = vector.load %arg3[%c0_5, %c0_6] : memref<1x128xf32, #tpu.memory_space<vmem>>, vector<1x128xf32>
    %5 = vector.broadcast %4 : vector<1x128xf32> to vector<32x128xf32>
    %6 = arith.addf %3, %5 : vector<32x128xf32>
    %7 = arith.addf %0, %6 : vector<32x128xf32>
    %c0_7 = arith.constant 0 : index
    %c0_8 = arith.constant 0 : index
    %8 = vector.load %arg4[%c0_7, %c0_8] : memref<1x128xf32, #tpu.memory_space<vmem>>, vector<1x128xf32>
    %c0_9 = arith.constant 0 : index
    %c0_10 = arith.constant 0 : index
    %9 = vector.load %arg5[%c0_9, %c0_10] : memref<1x128xf32, #tpu.memory_space<vmem>>, vector<1x128xf32>
    %cst_11 = arith.constant dense<0.000000e+00> : vector<32xf32>
    %10 = vector.multi_reduction <add>, %7, %cst_11 [1] : vector<32x128xf32> to vector<32xf32>
    %11 = vector.shape_cast %10 : vector<32xf32> to vector<32x1xf32>
    %cst_12 = arith.constant 1.280000e+02 : f32
    %12 = vector.broadcast %cst_12 : f32 to vector<32x1xf32>
    %13 = arith.divf %11, %12 : vector<32x1xf32>
    %14 = vector.broadcast %13 : vector<32x1xf32> to vector<32x128xf32>
    %15 = arith.subf %7, %14 : vector<32x128xf32>
    %16 = arith.mulf %15, %15 : vector<32x128xf32>
    %cst_13 = arith.constant dense<0.000000e+00> : vector<32xf32>
    %17 = vector.multi_reduction <add>, %16, %cst_13 [1] : vector<32x128xf32> to vector<32xf32>
    %18 = vector.shape_cast %17 : vector<32xf32> to vector<32x1xf32>
    %cst_14 = arith.constant 1.280000e+02 : f32
    %19 = vector.broadcast %cst_14 : f32 to vector<32x1xf32>
    %20 = arith.divf %18, %19 : vector<32x1xf32>
    %cst_15 = arith.constant 9.99999974E-6 : f32
    %21 = vector.broadcast %cst_15 : f32 to vector<32x1xf32>
    %22 = arith.addf %20, %21 : vector<32x1xf32>
    %23 = math.rsqrt %22 : vector<32x1xf32>
    %24 = vector.broadcast %23 : vector<32x1xf32> to vector<32x128xf32>
    %25 = arith.mulf %15, %24 : vector<32x128xf32>
    %26 = vector.broadcast %8 : vector<1x128xf32> to vector<32x128xf32>
    %27 = arith.mulf %25, %26 : vector<32x128xf32>
    %28 = vector.broadcast %9 : vector<1x128xf32> to vector<32x128xf32>
    %29 = arith.addf %27, %28 : vector<32x128xf32>
    %c0_16 = arith.constant 0 : index
    %c0_17 = arith.constant 0 : index
    %30 = vector.load %arg6[%c0_16, %c0_17] : memref<128x128xf32, #tpu.memory_space<vmem>>, vector<128x128xf32>
    %cst_18 = arith.constant dense<0.000000e+00> : vector<32x128xf32>
    %31 = tpu.matmul %29, %30, %cst_18 {dimension_numbers = #tpu.dot_dimension_numbers<[1], [0], [0], [1], [0, 0, 1, 1], [], []>} : vector<32x128xf32>, vector<128x128xf32>, vector<32x128xf32> -> vector<32x128xf32>
    %c0_19 = arith.constant 0 : index
    %c0_20 = arith.constant 0 : index
    %32 = vector.load %arg7[%c0_19, %c0_20] : memref<1x128xf32, #tpu.memory_space<vmem>>, vector<1x128xf32>
    %33 = vector.broadcast %32 : vector<1x128xf32> to vector<32x128xf32>
    %34 = arith.addf %31, %33 : vector<32x128xf32>
    %cst_21 = arith.constant 5.000000e-01 : f32
    %35 = vector.broadcast %cst_21 : f32 to vector<32x128xf32>
    %36 = arith.mulf %35, %34 : vector<32x128xf32>
    %cst_22 = arith.constant 0.707106769 : f32
    %37 = vector.broadcast %cst_22 : f32 to vector<32x128xf32>
    %38 = arith.mulf %34, %37 : vector<32x128xf32>
    %cst_23 = arith.constant 0.000000e+00 : f32
    %39 = vector.broadcast %cst_23 : f32 to vector<32x128xf32>
    %40 = arith.cmpf olt, %38, %39 : vector<32x128xf32>
    %cst_24 = arith.constant 0.000000e+00 : f32
    %41 = vector.broadcast %cst_24 : f32 to vector<32x128xf32>
    %42 = arith.subf %41, %38 : vector<32x128xf32>
    %43 = arith.select %40, %42, %38 : vector<32x128xi1>, vector<32x128xf32>
    %cst_25 = arith.constant 0.327591091 : f32
    %44 = vector.broadcast %cst_25 : f32 to vector<32x128xf32>
    %45 = arith.mulf %44, %43 : vector<32x128xf32>
    %cst_26 = arith.constant 1.000000e+00 : f32
    %46 = vector.broadcast %cst_26 : f32 to vector<32x128xf32>
    %47 = arith.addf %46, %45 : vector<32x128xf32>
    %cst_27 = arith.constant 1.000000e+00 : f32
    %48 = vector.broadcast %cst_27 : f32 to vector<32x128xf32>
    %49 = arith.divf %48, %47 : vector<32x128xf32>
    %cst_28 = arith.constant 1.06140542 : f32
    %50 = vector.broadcast %cst_28 : f32 to vector<32x128xf32>
    %51 = arith.mulf %50, %49 : vector<32x128xf32>
    %cst_29 = arith.constant -1.45315206 : f32
    %52 = vector.broadcast %cst_29 : f32 to vector<32x128xf32>
    %53 = arith.addf %51, %52 : vector<32x128xf32>
    %54 = arith.mulf %53, %49 : vector<32x128xf32>
    %cst_30 = arith.constant 1.42141378 : f32
    %55 = vector.broadcast %cst_30 : f32 to vector<32x128xf32>
    %56 = arith.addf %54, %55 : vector<32x128xf32>
    %57 = arith.mulf %56, %49 : vector<32x128xf32>
    %cst_31 = arith.constant -0.284496725 : f32
    %58 = vector.broadcast %cst_31 : f32 to vector<32x128xf32>
    %59 = arith.addf %57, %58 : vector<32x128xf32>
    %60 = arith.mulf %59, %49 : vector<32x128xf32>
    %cst_32 = arith.constant 0.254829586 : f32
    %61 = vector.broadcast %cst_32 : f32 to vector<32x128xf32>
    %62 = arith.addf %60, %61 : vector<32x128xf32>
    %63 = arith.mulf %62, %49 : vector<32x128xf32>
    %cst_33 = arith.constant 0.000000e+00 : f32
    %64 = vector.broadcast %cst_33 : f32 to vector<32x128xf32>
    %65 = arith.subf %64, %43 : vector<32x128xf32>
    %66 = arith.mulf %65, %43 : vector<32x128xf32>
    %67 = math.exp %66 : vector<32x128xf32>
    %68 = arith.mulf %63, %67 : vector<32x128xf32>
    %cst_34 = arith.constant 1.000000e+00 : f32
    %69 = vector.broadcast %cst_34 : f32 to vector<32x128xf32>
    %70 = arith.subf %69, %68 : vector<32x128xf32>
    %cst_35 = arith.constant 0.000000e+00 : f32
    %71 = vector.broadcast %cst_35 : f32 to vector<32x128xf32>
    %72 = arith.subf %71, %70 : vector<32x128xf32>
    %73 = arith.select %40, %72, %70 : vector<32x128xi1>, vector<32x128xf32>
    %cst_36 = arith.constant 1.000000e+00 : f32
    %74 = vector.broadcast %cst_36 : f32 to vector<32x128xf32>
    %75 = arith.addf %74, %73 : vector<32x128xf32>
    %76 = arith.mulf %36, %75 : vector<32x128xf32>
    %c0_37 = arith.constant 0 : index
    %c0_38 = arith.constant 0 : index
    %77 = vector.load %arg8[%c0_37, %c0_38] : memref<128x128xf32, #tpu.memory_space<vmem>>, vector<128x128xf32>
    %cst_39 = arith.constant dense<0.000000e+00> : vector<32x128xf32>
    %78 = tpu.matmul %76, %77, %cst_39 {dimension_numbers = #tpu.dot_dimension_numbers<[1], [0], [0], [1], [0, 0, 1, 1], [], []>} : vector<32x128xf32>, vector<128x128xf32>, vector<32x128xf32> -> vector<32x128xf32>
    %c0_40 = arith.constant 0 : index
    %c0_41 = arith.constant 0 : index
    %79 = vector.load %arg9[%c0_40, %c0_41] : memref<1x128xf32, #tpu.memory_space<vmem>>, vector<1x128xf32>
    %80 = vector.broadcast %79 : vector<1x128xf32> to vector<32x128xf32>
    %81 = arith.addf %78, %80 : vector<32x128xf32>
    %c0_42 = arith.constant 0 : index
    %c0_43 = arith.constant 0 : index
    %82 = vector.load %arg10[%c0_42, %c0_43] : memref<1x128xf32, #tpu.memory_space<vmem>>, vector<1x128xf32>
    %c0_44 = arith.constant 0 : index
    %c0_45 = arith.constant 0 : index
    %83 = vector.load %arg11[%c0_44, %c0_45] : memref<1x128xf32, #tpu.memory_space<vmem>>, vector<1x128xf32>
    %cst_46 = arith.constant dense<0.000000e+00> : vector<32xf32>
    %84 = vector.multi_reduction <add>, %81, %cst_46 [1] : vector<32x128xf32> to vector<32xf32>
    %85 = vector.shape_cast %84 : vector<32xf32> to vector<32x1xf32>
    %cst_47 = arith.constant 1.280000e+02 : f32
    %86 = vector.broadcast %cst_47 : f32 to vector<32x1xf32>
    %87 = arith.divf %85, %86 : vector<32x1xf32>
    %88 = vector.broadcast %87 : vector<32x1xf32> to vector<32x128xf32>
    %89 = arith.subf %81, %88 : vector<32x128xf32>
    %90 = arith.mulf %89, %89 : vector<32x128xf32>
    %cst_48 = arith.constant dense<0.000000e+00> : vector<32xf32>
    %91 = vector.multi_reduction <add>, %90, %cst_48 [1] : vector<32x128xf32> to vector<32xf32>
    %92 = vector.shape_cast %91 : vector<32xf32> to vector<32x1xf32>
    %cst_49 = arith.constant 1.280000e+02 : f32
    %93 = vector.broadcast %cst_49 : f32 to vector<32x1xf32>
    %94 = arith.divf %92, %93 : vector<32x1xf32>
    %cst_50 = arith.constant 9.99999974E-6 : f32
    %95 = vector.broadcast %cst_50 : f32 to vector<32x1xf32>
    %96 = arith.addf %94, %95 : vector<32x1xf32>
    %97 = math.rsqrt %96 : vector<32x1xf32>
    %98 = vector.broadcast %97 : vector<32x1xf32> to vector<32x128xf32>
    %99 = arith.mulf %89, %98 : vector<32x128xf32>
    %100 = vector.broadcast %82 : vector<1x128xf32> to vector<32x128xf32>
    %101 = arith.mulf %99, %100 : vector<32x128xf32>
    %102 = vector.broadcast %83 : vector<1x128xf32> to vector<32x128xf32>
    %103 = arith.addf %101, %102 : vector<32x128xf32>
    %104 = arith.addf %29, %103 : vector<32x128xf32>
    %c0_51 = arith.constant 0 : index
    %c0_52 = arith.constant 0 : index
    %105 = vector.load %arg12[%c0_51, %c0_52] : memref<32x128xf32, #tpu.memory_space<vmem>>, vector<32x128xf32>
    tpu.vector_store %arg12[%c0_51, %c0_52], %104 {strides = array<i32>} : memref<32x128xf32, #tpu.memory_space<vmem>>, vector<32x128xf32>,
    return
  }
}

</mosaic_0001>

<llo_original>
// kernel: encoder_forward.3
$region0: #{encoder_forward.3}
  #allocation0 [shape = 'u32[]', space=smem, size = 0x4, offset = 0x4, fixed_abs, tag = 'smem constant byte address 0x4 - core index']
  #allocation1 [shape = 'u32[144,128]{1,0:T(1,128)}', space=vmem, size = 0x12000, scoped, tag = 'internal scratch']
  %s0 = inlined_call_operand.vmem [shape: f32[32,128], index: 0, kind: input, shape index: {}]
  %s1 = inlined_call_operand.vmem [shape: f32[128,384], index: 1, kind: input, shape index: {}]
  %s2 = inlined_call_operand.vmem [shape: f32[1,384], index: 2, kind: input, shape index: {}]
  %s3 = inlined_call_operand.vmem [shape: f32[32,384], index: 3, kind: output, shape index: {}]
  %s4 = sld [smem:[#allocation0]]
  $region22: #{encoder_forward.3} parent=0
    _
  %s6 = ssub.s32 1, %s4
  %s7 = scalar_select 0, %s6, %s4
  // Predicated region
  $region2: #{encoder_forward.3} parent=0 // pred_check
    _
  $region3: #{encoder_forward.3} parent=0 // pred_check_branch
    %9 = sbr.rel (0) target = $region5
  $region4: #{encoder_forward.3} parent=0 // pred_region
    _
  $region5: #{encoder_forward.3} parent=0 // pred_fallthru
    _
  // Predicated region
  $region6: #{encoder_forward.3} parent=0 // pred_check
    _
  $region7: #{encoder_forward.3} parent=0 // pred_check_branch
    %11 = sbr.rel (0) target = $region9
  $region8: #{encoder_forward.3} parent=0 // pred_region
    _
  $region9: #{encoder_forward.3} parent=0 // pred_fallthru
    _
  // Predicated region
  $region10: #{encoder_forward.3} parent=0 // pred_check
    _
  $region11: #{encoder_forward.3} parent=0 // pred_check_branch
    %13 = sbr.rel (0) target = $region13
  $region12: #{encoder_forward.3} parent=0 // pred_region
    _
  $region13: #{encoder_forward.3} parent=0 // pred_fallthru
    _
  %v14 = vld [vmem:[%s0] sm:$0xff]
  %v15 = vld [vmem:[%s0 + $0x8] sm:$0xff]
  %v16 = vld [vmem:[%s0 + $0x10] sm:$0xff]
  %v17 = vld [vmem:[%s0 + $0x18] sm:$0xff]
  %v18 = vld [vmem:[%s1] sm:$0xff]
  %v19 = vld [vmem:[%s1 + $0x8] sm:$0xff]
  %v20 = vld [vmem:[%s1 + $0x10] sm:$0xff]
  %v21 = vld [vmem:[%s1 + $0x18] sm:$0xff]
  %v22 = vld [vmem:[%s1 + $0x20] sm:$0xff]
  %v23 = vld [vmem:[%s1 + $0x28] sm:$0xff]
  %v24 = vld [vmem:[%s1 + $0x30] sm:$0xff]
  %v25 = vld [vmem:[%s1 + $0x38] sm:$0xff]
  %v26 = vld [vmem:[%s1 + $0x40] sm:$0xff]
  %v27 = vld [vmem:[%s1 + $0x48] sm:$0xff]
  %v28 = vld [vmem:[%s1 + $0x50] sm:$0xff]
  %v29 = vld [vmem:[%s1 + $0x58] sm:$0xff]
  %v30 = vld [vmem:[%s1 + $0x60] sm:$0xff]
  %v31 = vld [vmem:[%s1 + $0x68] sm:$0xff]
  %v32 = vld [vmem:[%s1 + $0x70] sm:$0xff]
  %v33 = vld [vmem:[%s1 + $0x78] sm:$0xff]
  %v34 = vld [vmem:[%s1 + $0x80] sm:$0xff]
  %v35 = vld [vmem:[%s1 + $0x88] sm:$0xff]
  %v36 = vld [vmem:[%s1 + $0x90] sm:$0xff]
  %v37 = vld [vmem:[%s1 + $0x98] sm:$0xff]
  %v38 = vld [vmem:[%s1 + $0xa0] sm:$0xff]
  %v39 = vld [vmem:[%s1 + $0xa8] sm:$0xff]
  %v40 = vld [vmem:[%s1 + $0xb0] sm:$0xff]
  %v41 = vld [vmem:[%s1 + $0xb8] sm:$0xff]
  %v42 = vld [vmem:[%s1 + $0xc0] sm:$0xff]
  %v43 = vld [vmem:[%s1 + $0xc8] sm:$0xff]
  %v44 = vld [vmem:[%s1 + $0xd0] sm:$0xff]
  %v45 = vld [vmem:[%s1 + $0xd8] sm:$0xff]
  %v46 = vld [vmem:[%s1 + $0xe0] sm:$0xff]
  %v47 = vld [vmem:[%s1 + $0xe8] sm:$0xff]
  %v48 = vld [vmem:[%s1 + $0xf0] sm:$0xff]
  %v49 = vld [vmem:[%s1 + $0xf8] sm:$0xff]
  %v50 = vld [vmem:[%s1 + $0x100] sm:$0xff]
  %v51 = vld [vmem:[%s1 + $0x108] sm:$0xff]
  %v52 = vld [vmem:[%s1 + $0x110] sm:$0xff]
  %v53 = vld [vmem:[%s1 + $0x118] sm:$0xff]
  %v54 = vld [vmem:[%s1 + $0x120] sm:$0xff]
  %v55 = vld [vmem:[%s1 + $0x128] sm:$0xff]
  %v56 = vld [vmem:[%s1 + $0x130] sm:$0xff]
  %v57 = vld [vmem:[%s1 + $0x138] sm:$0xff]
  %v58 = vld [vmem:[%s1 + $0x140] sm:$0xff]
  %v59 = vld [vmem:[%s1 + $0x148] sm:$0xff]
  %v60 = vld [vmem:[%s1 + $0x150] sm:$0xff]
  %v61 = vld [vmem:[%s1 + $0x158] sm:$0xff]
  %v62 = vld [vmem:[%s1 + $0x160] sm:$0xff]
  %v63 = vld [vmem:[%s1 + $0x168] sm:$0xff]
  %v64 = vld [vmem:[%s1 + $0x170] sm:$0xff]
  %v65 = vld [vmem:[%s1 + $0x178] sm:$0xff]
  %v66 = vld [vmem:[%s2] sm:$0x7]
  %v68 = vlaneseq
  %v69 = vshrl.u32 %v68, 7
  %v70 = vsub.s32 0, %v69
  %v71 = vrot.slane %v66, %v70
  %v72 = vlaneseq
  %v73 = vshrl.u32 %v72, 7
  %v74 = vsub.s32 1, %v73
  %v75 = vrot.slane %v66, %v74
  %v76 = vlaneseq
  %v77 = vshrl.u32 %v76, 7
  %v78 = vsub.s32 2, %v77
  %v79 = vrot.slane %v66, %v78
  %83 = vmatprep.subr.mxu0 %v19
  %84 = vmatpush1.msra.mxu0 %v18
  %85 = vmatprep.subr.mxu0 %v22
  %86 = vmatpush1.msra.mxu0 %v21
  %87 = vmatprep.subr.mxu0 %v25
  %88 = vmatpush1.msra.mxu0 %v24
  %89 = vmatprep.subr.mxu0 %v28
  %90 = vmatpush1.msra.mxu0 %v27
  %91 = vmatprep.subr.mxu0 %v31
  %92 = vmatpush1.msra.mxu0 %v30
  %93 = vmatprep.subr.mxu0 %v34
  %94 = vmatpush1.msra.mxu0 %v33
  %95 = vmatprep.subr.mxu0 %v37
  %96 = vmatpush1.msra.mxu0 %v36
  %97 = vmatprep.subr.mxu0 %v40
  %98 = vmatpush1.msra.mxu0 %v39
  %99 = vmatprep.subr.mxu0 %v43
  %100 = vmatpush1.msra.mxu0 %v42
  %101 = vmatprep.subr.mxu0 %v46
  %102 = vmatpush1.msra.mxu0 %v45
  %103 = vmatprep.subr.mxu0 %v49
  %104 = vmatpush1.msra.mxu0 %v48
  %105 = vmatprep.subr.mxu0 %v52
  %106 = vmatpush1.msra.mxu0 %v51
  %107 = vmatprep.subr.mxu0 %v55
  %108 = vmatpush1.msra.mxu0 %v54
  %109 = vmatprep.subr.mxu0 %v58
  %110 = vmatpush1.msra.mxu0 %v57
  %111 = vmatprep.subr.mxu0 %v61
  %112 = vmatpush1.msra.mxu0 %v60
  %113 = vmatprep.subr.mxu0 %v64
  %114 = vmatpush1.msra.mxu0 %v63
  %115 = vmatprep.subr.mxu0 0.0
  %116 = vmatpush1.msra.mxu0 0.0
  %117 = vmatprep.subr.mxu0 0.0
  %118 = vmatpush1.msra.mxu0 0.0
  %119 = vmatprep.subr.mxu0 0.0
  %120 = vmatpush1.msra.mxu0 0.0
  %121 = vmatprep.subr.mxu0 0.0
  %122 = vmatpush1.msra.mxu0 0.0
  %123 = vmatprep.subr.mxu0 0.0
  %124 = vmatpush1.msra.mxu0 0.0
  %125 = vmatprep.subr.mxu0 0.0
  %126 = vmatpush1.msra.mxu0 0.0
  %127 = vmatprep.subr.mxu0 0.0
  %128 = vmatpush1.msra.mxu0 0.0
  %129 = vmatprep.subr.mxu0 0.0
  %130 = vmatpush1.msra.mxu0 0.0
  %131 = vmatprep.subr.mxu0 0.0
  %132 = vmatpush1.msra.mxu0 0.0
  %133 = vmatprep.subr.mxu0 0.0
  %134 = vmatpush1.msra.mxu0 0.0
  %135 = vmatprep.subr.mxu0 0.0
  %136 = vmatpush1.msra.mxu0 0.0
  %137 = vmatprep.subr.mxu0 0.0
  %138 = vmatpush1.msra.mxu0 0.0
  %139 = vmatprep.subr.mxu0 0.0
  %140 = vmatpush1.msra.mxu0 0.0
  %141 = vmatprep.subr.mxu0 0.0
  %142 = vmatpush1.msra.mxu0 0.0
  %143 = vmatprep.subr.mxu0 0.0
  %144 = vmatpush1.msra.mxu0 0.0
  %145 = vmatprep.subr.mxu0 0.0
  %146 = vmatpush1.msra.mxu0 0.0
  %147 = vmatprep.mubr.f32.mxu0 0.0
  %148 = vmatmul.mubr.f32.gmra.mrb[0].mxu0 %v14
  %v149 = vpop.f32.mrb[0].mxu0
  %v150 = vadd.f32 %v71, %v149
  %v151 = vpop.f32.mrb[0].mxu0
  %v152 = vadd.f32 %v75, %v151
  %153 = vmatprep.mubr.f32.mxu0 0.0
  %154 = vmatmul.mubr.f32.gmra.mrb[0].mxu0 %v15
  %v155 = vpop.f32.mrb[0].mxu0
  %v156 = vadd.f32 %v71, %v155
  %v157 = vpop.f32.mrb[0].mxu0
  %v158 = vadd.f32 %v75, %v157
  %159 = vmatprep.mubr.f32.mxu0 0.0
  %160 = vmatmul.mubr.f32.gmra.mrb[0].mxu0 %v16
  %v161 = vpop.f32.mrb[0].mxu0
  %v162 = vadd.f32 %v71, %v161
  %v163 = vpop.f32.mrb[0].mxu0
  %v164 = vadd.f32 %v75, %v163
  %165 = vmatprep.mubr.f32.mxu0 0.0
  %166 = vmatmul.mubr.f32.gmra.mrb[0].mxu0 %v17
  %v167 = vpop.f32.mrb[0].mxu0
  %v168 = vadd.f32 %v71, %v167
  %v169 = vpop.f32.mrb[0].mxu0
  %v170 = vadd.f32 %v75, %v169
  %171 = vdwg.mxu0
  %172 = vmatprep.subr.mxu0 0.0
  %173 = vmatpush1.msra.mxu0 %v20
  %174 = vmatprep.subr.mxu0 0.0
  %175 = vmatpush1.msra.mxu0 %v23
  %176 = vmatprep.subr.mxu0 0.0
  %177 = vmatpush1.msra.mxu0 %v26
  %178 = vmatprep.subr.mxu0 0.0
  %179 = vmatpush1.msra.mxu0 %v29
  %180 = vmatprep.subr.mxu0 0.0
  %181 = vmatpush1.msra.mxu0 %v32
  %182 = vmatprep.subr.mxu0 0.0
  %183 = vmatpush1.msra.mxu0 %v35
  %184 = vmatprep.subr.mxu0 0.0
  %185 = vmatpush1.msra.mxu0 %v38
  %186 = vmatprep.subr.mxu0 0.0
  %187 = vmatpush1.msra.mxu0 %v41
  %188 = vmatprep.subr.mxu0 0.0
  %189 = vmatpush1.msra.mxu0 %v44
  %190 = vmatprep.subr.mxu0 0.0
  %191 = vmatpush1.msra.mxu0 %v47
  %192 = vmatprep.subr.mxu0 0.0
  %193 = vmatpush1.msra.mxu0 %v50
  %194 = vmatprep.subr.mxu0 0.0
  %195 = vmatpush1.msra.mxu0 %v53
  %196 = vmatprep.subr.mxu0 0.0
  %197 = vmatpush1.msra.mxu0 %v56
  %198 = vmatprep.subr.mxu0 0.0
  %199 = vmatpush1.msra.mxu0 %v59
  %200 = vmatprep.subr.mxu0 0.0
  %201 = vmatpush1.msra.mxu0 %v62
  %202 = vmatprep.subr.mxu0 0.0
  %203 = vmatpush1.msra.mxu0 %v65
  %204 = vmatprep.subr.mxu0 0.0
  %205 = vmatpush1.msra.mxu0 0.0
  %206 = vmatprep.subr.mxu0 0.0
  %207 = vmatpush1.msra.mxu0 0.0
  %208 = vmatprep.subr.mxu0 0.0
  %209 = vmatpush1.msra.mxu0 0.0
  %210 = vmatprep.subr.mxu0 0.0
  %211 = vmatpush1.msra.mxu0 0.0
  %212 = vmatprep.subr.mxu0 0.0
  %213 = vmatpush1.msra.mxu0 0.0
  %214 = vmatprep.subr.mxu0 0.0
  %215 = vmatpush1.msra.mxu0 0.0
  %216 = vmatprep.subr.mxu0 0.0
  %217 = vmatpush1.msra.mxu0 0.0
  %218 = vmatprep.subr.mxu0 0.0
  %219 = vmatpush1.msra.mxu0 0.0
  %220 = vmatprep.subr.mxu0 0.0
  %221 = vmatpush1.msra.mxu0 0.0
  %222 = vmatprep.subr.mxu0 0.0
  %223 = vmatpush1.msra.mxu0 0.0
  %224 = vmatprep.subr.mxu0 0.0
  %225 = vmatpush1.msra.mxu0 0.0
  %226 = vmatprep.subr.mxu0 0.0
  %227 = vmatpush1.msra.mxu0 0.0
  %228 = vmatprep.subr.mxu0 0.0
  %229 = vmatpush1.msra.mxu0 0.0
  %230 = vmatprep.subr.mxu0 0.0
  %231 = vmatpush1.msra.mxu0 0.0
  %232 = vmatprep.subr.mxu0 0.0
  %233 = vmatpush1.msra.mxu0 0.0
  %234 = vmatprep.subr.mxu0 0.0
  %235 = vmatpush1.msra.mxu0 0.0
  %236 = vmatprep.mubr.f32.mxu0 0.0
  %237 = vmatmul.mubr.f32.gmra.mrb[0].mxu0 %v14
  %v238 = vpop.f32.mrb[0].mxu0
  %v239 = vadd.f32 %v79, %v238
  %v240 = vpop.f32.mrb[0].mxu0
  %241 = vmatprep.mubr.f32.mxu0 0.0
  %242 = vmatmul.mubr.f32.gmra.mrb[0].mxu0 %v15
  %v243 = vpop.f32.mrb[0].mxu0
  %v244 = vadd.f32 %v79, %v243
  %v245 = vpop.f32.mrb[0].mxu0
  %246 = vmatprep.mubr.f32.mxu0 0.0
  %247 = vmatmul.mubr.f32.gmra.mrb[0].mxu0 %v16
  %v248 = vpop.f32.mrb[0].mxu0
  %v249 = vadd.f32 %v79, %v248
  %v250 = vpop.f32.mrb[0].mxu0
  %251 = vmatprep.mubr.f32.mxu0 0.0
  %252 = vmatmul.mubr.f32.gmra.mrb[0].mxu0 %v17
  %v253 = vpop.f32.mrb[0].mxu0
  %v254 = vadd.f32 %v79, %v253
  %v255 = vpop.f32.mrb[0].mxu0
  %256 = vdwg.mxu0
  %257 = vst [vmem:[%s3] sm:$0xff] %v150
  %258 = vst [vmem:[%s3 + $0x8] sm:$0xff] %v152
  %259 = vst [vmem:[%s3 + $0x10] sm:$0xff] %v239
  %260 = vst [vmem:[%s3 + $0x18] sm:$0xff] %v156
  %261 = vst [vmem:[%s3 + $0x20] sm:$0xff] %v158
  %262 = vst [vmem:[%s3 + $0x28] sm:$0xff] %v244
  %263 = vst [vmem:[%s3 + $0x30] sm:$0xff] %v162
  %264 = vst [vmem:[%s3 + $0x38] sm:$0xff] %v164
  %265 = vst [vmem:[%s3 + $0x40] sm:$0xff] %v249
  %266 = vst [vmem:[%s3 + $0x48] sm:$0xff] %v168
  %267 = vst [vmem:[%s3 + $0x50] sm:$0xff] %v170
  %268 = vst [vmem:[%s3 + $0x58] sm:$0xff] %v254
  // Predicated region
  $region14: #{encoder_forward.3} parent=0 // pred_check
    _
  $region15: #{encoder_forward.3} parent=0 // pred_check_branch
    %270 = sbr.rel (0) target = $region17
  $region16: #{encoder_forward.3} parent=0 // pred_region
    _
  $region17: #{encoder_forward.3} parent=0 // pred_fallthru
    _
  // Predicated region
  $region18: #{encoder_forward.3} parent=0 // pred_check
    _
  $region19: #{encoder_forward.3} parent=0 // pred_check_branch
    %272 = sbr.rel (0) target = $region21
  $region20: #{encoder_forward.3} parent=0 // pred_region
    _
  $region21: #{encoder_forward.3} parent=0 // pred_fallthru
    _

// kernel: encoder_forward.5
$region0: #{encoder_forward.5}
  #allocation0 [shape = 'u32[]', space=smem, size = 0x4, offset = 0x4, fixed_abs, tag = 'smem constant byte address 0x4 - core index']
  #allocation1 [shape = 'u32[144,128]{1,0:T(1,128)}', space=vmem, size = 0x12000, scoped, tag = 'internal scratch']
  %s0 = inlined_call_operand.vmem [shape: f32[32,128], index: 0, kind: input, shape index: {}]
  %s1 = inlined_call_operand.vmem [shape: f32[32,128], index: 1, kind: input, shape index: {}]
  %s2 = inlined_call_operand.vmem [shape: f32[128,128], index: 2, kind: input, shape index: {}]
  %s3 = inlined_call_operand.vmem [shape: f32[1,128], index: 3, kind: input, shape index: {}]
  %s4 = inlined_call_operand.vmem [shape: f32[1,128], index: 4, kind: input, shape index: {}]
  %s5 = inlined_call_operand.vmem [shape: f32[1,128], index: 5, kind: input, shape index: {}]
  %s6 = inlined_call_operand.vmem [shape: f32[128,128], index: 6, kind: input, shape index: {}]
  %s7 = inlined_call_operand.vmem [shape: f32[1,128], index: 7, kind: input, shape index: {}]
  %s8 = inlined_call_operand.vmem [shape: f32[128,128], index: 8, kind: input, shape index: {}]
  %s9 = inlined_call_operand.vmem [shape: f32[1,128], index: 9, kind: input, shape index: {}]
  %s10 = inlined_call_operand.vmem [shape: f32[1,128], index: 10, kind: input, shape index: {}]
  %s11 = inlined_call_operand.vmem [shape: f32[1,128], index: 11, kind: input, shape index: {}]
  %s12 = inlined_call_operand.hbm [shape: f32[32,128], index: 12, kind: output, shape index: {}]
  %s13 = sld [smem:[#allocation0]]
  $region58: #{encoder_forward.5} parent=0
    _
  %s15 = ssub.s32 1, %s13
  %s16 = scalar_select 0, %s15, %s13
  $region1: #{encoder_forward.5} parent=0
    #allocation2 [shape = 'u8[16384]{0}', space=vmem, size = 0x4000, scoped, tag = 'output window, operand 0, single buffered']
    #allocation3 [shape = 's32[1]{0}', space=sflag, size = 0x4, scoped, tag = 'scoped memory for encoder_forward.5']
    %17 = vsyncpa [#allocation3], 0
    // Predicated region
    $region2: #{encoder_forward.5} parent=1 // pred_check
      _
    $region3: #{encoder_forward.5} parent=1 // pred_check_branch
      %19 = sbr.rel (0) target = $region5
    $region4: #{encoder_forward.5} parent=1 // pred_region
      _
    $region5: #{encoder_forward.5} parent=1 // pred_fallthru
      _
    // Predicated region
    $region6: #{encoder_forward.5} parent=1 // pred_check
      _
    $region7: #{encoder_forward.5} parent=1 // pred_check_branch
      %21 = sbr.rel (0) target = $region9
    $region8: #{encoder_forward.5} parent=1 // pred_region
      _
    $region9: #{encoder_forward.5} parent=1 // pred_fallthru
      _
    // Predicated region
    $region10: #{encoder_forward.5} parent=1 // pred_check
      _
    $region11: #{encoder_forward.5} parent=1 // pred_check_branch
      %23 = sbr.rel (0) target = $region13
    $region12: #{encoder_forward.5} parent=1 // pred_region
      _
    $region13: #{encoder_forward.5} parent=1 // pred_fallthru
      _
    // Predicated region
    $region14: #{encoder_forward.5} parent=1 // pred_check
      _
    $region15: #{encoder_forward.5} parent=1 // pred_check_branch
      %25 = sbr.rel (0) target = $region17
    $region16: #{encoder_forward.5} parent=1 // pred_region
      _
    $region17: #{encoder_forward.5} parent=1 // pred_fallthru
      _
    // Predicated region
    $region18: #{encoder_forward.5} parent=1 // pred_check
      _
    $region19: #{encoder_forward.5} parent=1 // pred_check_branch
      %27 = sbr.rel (0) target = $region21
    $region20: #{encoder_forward.5} parent=1 // pred_region
      _
    $region21: #{encoder_forward.5} parent=1 // pred_fallthru
      _
    // Predicated region
    $region22: #{encoder_forward.5} parent=1 // pred_check
      _
    $region23: #{encoder_forward.5} parent=1 // pred_check_branch
      %29 = sbr.rel (0) target = $region25
    $region24: #{encoder_forward.5} parent=1 // pred_region
      _
    $region25: #{encoder_forward.5} parent=1 // pred_fallthru
      _
    // Predicated region
    $region26: #{encoder_forward.5} parent=1 // pred_check
      _
    $region27: #{encoder_forward.5} parent=1 // pred_check_branch
      %31 = sbr.rel (0) target = $region29
    $region28: #{encoder_forward.5} parent=1 // pred_region
      _
    $region29: #{encoder_forward.5} parent=1 // pred_fallthru
      _
    // Predicated region
    $region30: #{encoder_forward.5} parent=1 // pred_check
      _
    $region31: #{encoder_forward.5} parent=1 // pred_check_branch
      %33 = sbr.rel (0) target = $region33
    $region32: #{encoder_forward.5} parent=1 // pred_region
      _
    $region33: #{encoder_forward.5} parent=1 // pred_fallthru
      _
    // Predicated region
    $region34: #{encoder_forward.5} parent=1 // pred_check
      _
    $region35: #{encoder_forward.5} parent=1 // pred_check_branch
      %35 = sbr.rel (0) target = $region37
    $region36: #{encoder_forward.5} parent=1 // pred_region
      _
    $region37: #{encoder_forward.5} parent=1 // pred_fallthru
      _
    // Predicated region
    $region38: #{encoder_forward.5} parent=1 // pred_check
      _
    $region39: #{encoder_forward.5} parent=1 // pred_check_branch
      %37 = sbr.rel (0) target = $region41
    $region40: #{encoder_forward.5} parent=1 // pred_region
      _
    $region41: #{encoder_forward.5} parent=1 // pred_fallthru
      _
    // Predicated region
    $region42: #{encoder_forward.5} parent=1 // pred_check
      _
    $region43: #{encoder_forward.5} parent=1 // pred_check_branch
      %39 = sbr.rel (0) target = $region45
    $region44: #{encoder_forward.5} parent=1 // pred_region
      _
    $region45: #{encoder_forward.5} parent=1 // pred_fallthru
      _
    // Predicated region
    $region46: #{encoder_forward.5} parent=1 // pred_check
      _
    $region47: #{encoder_forward.5} parent=1 // pred_check_branch
      %41 = sbr.rel (0) target = $region49
    $region48: #{encoder_forward.5} parent=1 // pred_region
      _
    $region49: #{encoder_forward.5} parent=1 // pred_fallthru
      _
    %v42 = vld [vmem:[%s1] sm:$0xff]
    %v43 = vld [vmem:[%s1 + $0x8] sm:$0xff]
    %v44 = vld [vmem:[%s1 + $0x10] sm:$0xff]
    %v45 = vld [vmem:[%s1 + $0x18] sm:$0xff]
    %v46 = vld [vmem:[%s0] sm:$0xff]
    %v47 = vld [vmem:[%s0 + $0x8] sm:$0xff]
    %v48 = vld [vmem:[%s0 + $0x10] sm:$0xff]
    %v49 = vld [vmem:[%s0 + $0x18] sm:$0xff]
    %v50 = vld [vmem:[%s2] sm:$0xff]
    %v51 = vld [vmem:[%s2 + $0x8] sm:$0xff]
    %v52 = vld [vmem:[%s2 + $0x10] sm:$0xff]
    %v53 = vld [vmem:[%s2 + $0x18] sm:$0xff]
    %v54 = vld [vmem:[%s2 + $0x20] sm:$0xff]
    %v55 = vld [vmem:[%s2 + $0x28] sm:$0xff]
    %v56 = vld [vmem:[%s2 + $0x30] sm:$0xff]
    %v57 = vld [vmem:[%s2 + $0x38] sm:$0xff]
    %v58 = vld [vmem:[%s2 + $0x40] sm:$0xff]
    %v59 = vld [vmem:[%s2 + $0x48] sm:$0xff]
    %v60 = vld [vmem:[%s2 + $0x50] sm:$0xff]
    %v61 = vld [vmem:[%s2 + $0x58] sm:$0xff]
    %v62 = vld [vmem:[%s2 + $0x60] sm:$0xff]
    %v63 = vld [vmem:[%s2 + $0x68] sm:$0xff]
    %v64 = vld [vmem:[%s2 + $0x70] sm:$0xff]
    %v65 = vld [vmem:[%s2 + $0x78] sm:$0xff]
    %v66 = vld [vmem:[%s3] sm:$0x1]
    %v68 = vlaneseq
    %v69 = vshrl.u32 %v68, 7
    %v70 = vsub.s32 0, %v69
    %v71 = vrot.slane %v66, %v70
    %73 = vmatprep.subr.mxu0 0.0
    %74 = vmatpush1.msra.mxu0 %v50
    %75 = vmatprep.subr.mxu0 0.0
    %76 = vmatpush1.msra.mxu0 %v51
    %77 = vmatprep.subr.mxu0 0.0
    %78 = vmatpush1.msra.mxu0 %v52
    %79 = vmatprep.subr.mxu0 0.0
    %80 = vmatpush1.msra.mxu0 %v53
    %81 = vmatprep.subr.mxu0 0.0
    %82 = vmatpush1.msra.mxu0 %v54
    %83 = vmatprep.subr.mxu0 0.0
    %84 = vmatpush1.msra.mxu0 %v55
    %85 = vmatprep.subr.mxu0 0.0
    %86 = vmatpush1.msra.mxu0 %v56
    %87 = vmatprep.subr.mxu0 0.0
    %88 = vmatpush1.msra.mxu0 %v57
    %89 = vmatprep.subr.mxu0 0.0
    %90 = vmatpush1.msra.mxu0 %v58
    %91 = vmatprep.subr.mxu0 0.0
    %92 = vmatpush1.msra.mxu0 %v59
    %93 = vmatprep.subr.mxu0 0.0
    %94 = vmatpush1.msra.mxu0 %v60
    %95 = vmatprep.subr.mxu0 0.0
    %96 = vmatpush1.msra.mxu0 %v61
    %97 = vmatprep.subr.mxu0 0.0
    %98 = vmatpush1.msra.mxu0 %v62
    %99 = vmatprep.subr.mxu0 0.0
    %100 = vmatpush1.msra.mxu0 %v63
    %101 = vmatprep.subr.mxu0 0.0
    %102 = vmatpush1.msra.mxu0 %v64
    %103 = vmatprep.subr.mxu0 0.0
    %104 = vmatpush1.msra.mxu0 %v65
    %105 = vmatprep.subr.mxu0 0.0
    %106 = vmatpush1.msra.mxu0 0.0
    %107 = vmatprep.subr.mxu0 0.0
    %108 = vmatpush1.msra.mxu0 0.0
    %109 = vmatprep.subr.mxu0 0.0
    %110 = vmatpush1.msra.mxu0 0.0
    %111 = vmatprep.subr.mxu0 0.0
    %112 = vmatpush1.msra.mxu0 0.0
    %113 = vmatprep.subr.mxu0 0.0
    %114 = vmatpush1.msra.mxu0 0.0
    %115 = vmatprep.subr.mxu0 0.0
    %116 = vmatpush1.msra.mxu0 0.0
    %117 = vmatprep.subr.mxu0 0.0
    %118 = vmatpush1.msra.mxu0 0.0
    %119 = vmatprep.subr.mxu0 0.0
    %120 = vmatpush1.msra.mxu0 0.0
    %121 = vmatprep.subr.mxu0 0.0
    %122 = vmatpush1.msra.mxu0 0.0
    %123 = vmatprep.subr.mxu0 0.0
    %124 = vmatpush1.msra.mxu0 0.0
    %125 = vmatprep.subr.mxu0 0.0
    %126 = vmatpush1.msra.mxu0 0.0
    %127 = vmatprep.subr.mxu0 0.0
    %128 = vmatpush1.msra.mxu0 0.0
    %129 = vmatprep.subr.mxu0 0.0
    %130 = vmatpush1.msra.mxu0 0.0
    %131 = vmatprep.subr.mxu0 0.0
    %132 = vmatpush1.msra.mxu0 0.0
    %133 = vmatprep.subr.mxu0 0.0
    %134 = vmatpush1.msra.mxu0 0.0
    %135 = vmatprep.subr.mxu0 0.0
    %136 = vmatpush1.msra.mxu0 0.0
    %137 = vmatprep.mubr.f32.mxu0 0.0
    %138 = vmatmul.mubr.f32.gmra.mrb[0].mxu0 %v46
    %v139 = vpop.f32.mrb[0].mxu0
    %v140 = vadd.f32 %v71, %v139
    %v141 = vpop.f32.mrb[0].mxu0
    %142 = vmatprep.mubr.f32.mxu0 0.0
    %143 = vmatmul.mubr.f32.gmra.mrb[0].mxu0 %v47
    %v144 = vpop.f32.mrb[0].mxu0
    %v145 = vadd.f32 %v71, %v144
    %v146 = vpop.f32.mrb[0].mxu0
    %147 = vmatprep.mubr.f32.mxu0 0.0
    %148 = vmatmul.mubr.f32.gmra.mrb[0].mxu0 %v48
    %v149 = vpop.f32.mrb[0].mxu0
    %v150 = vadd.f32 %v71, %v149
    %v151 = vpop.f32.mrb[0].mxu0
    %152 = vmatprep.mubr.f32.mxu0 0.0
    %153 = vmatmul.mubr.f32.gmra.mrb[0].mxu0 %v49
    %v154 = vpop.f32.mrb[0].mxu0
    %v155 = vadd.f32 %v71, %v154
    %v156 = vpop.f32.mrb[0].mxu0
    %157 = vdwg.mxu0
    %v158 = vadd.f32 %v42, %v140
    %v159 = vadd.f32 %v43, %v145
    %v160 = vadd.f32 %v44, %v150
    %v161 = vadd.f32 %v45, %v155
    %v162 = vld [vmem:[%s4] sm:$0x1]
    %v163 = vld [vmem:[%s5] sm:$0x1]
    %164 = vadd.xlane.f32.xlu0 %v158
    %v165 = vpop.xlane.xlu0 %164
    %166 = vadd.xlane.f32.xlu0 %v159
    %v167 = vpop.xlane.xlu0 %166
    %168 = vadd.xlane.f32.xlu0 %v160
    %v169 = vpop.xlane.xlu0 %168
    %170 = vadd.xlane.f32.xlu0 %v161
    %v171 = vpop.xlane.xlu0 %170
    %v172 = vrcp.pop 128.0
    %v173 = vmul.f32 %v165, %v172
    %v174 = vmul.f32 %v167, %v172
    %v175 = vmul.f32 %v169, %v172
    %v176 = vmul.f32 %v171, %v172
    %v177 = vsub.f32 %v158, %v173
    %v178 = vsub.f32 %v159, %v174
    %v179 = vsub.f32 %v160, %v175
    %v180 = vsub.f32 %v161, %v176
    %v181 = vmul.f32 %v177, %v177
    %v182 = vmul.f32 %v178, %v178
    %v183 = vmul.f32 %v179, %v179
    %v184 = vmul.f32 %v180, %v180
    %185 = vadd.xlane.f32.xlu0 %v181
    %v186 = vpop.xlane.xlu0 %185
    %187 = vadd.xlane.f32.xlu0 %v182
    %v188 = vpop.xlane.xlu0 %187
    %189 = vadd.xlane.f32.xlu0 %v183
    %v190 = vpop.xlane.xlu0 %189
    %191 = vadd.xlane.f32.xlu0 %v184
    %v192 = vpop.xlane.xlu0 %191
    %v193 = vmul.f32 %v186, %v172
    %v194 = vmul.f32 %v188, %v172
    %v195 = vmul.f32 %v190, %v172
    %v196 = vmul.f32 %v192, %v172
    %v197 = vadd.f32 %v193, 1e-05
    %v198 = vadd.f32 %v194, 1e-05
    %v199 = vadd.f32 %v195, 1e-05
    %v200 = vadd.f32 %v196, 1e-05
    %v201 = vrsqrt.pop %v197
    %v202 = vrsqrt.pop %v198
    %v203 = vrsqrt.pop %v199
    %v204 = vrsqrt.pop %v200
    %v205 = vmul.f32 %v177, %v201
    %v206 = vmul.f32 %v178, %v202
    %v207 = vmul.f32 %v179, %v203
    %v208 = vmul.f32 %v180, %v204
    %v210 = vlaneseq
    %v211 = vshrl.u32 %v210, 7
    %v212 = vsub.s32 0, %v211
    %v213 = vrot.slane %v162, %v212
    %v215 = vmul.f32 %v205, %v213
    %v216 = vmul.f32 %v206, %v213
    %v217 = vmul.f32 %v207, %v213
    %v218 = vmul.f32 %v208, %v213
    %v220 = vlaneseq
    %v221 = vshrl.u32 %v220, 7
    %v222 = vsub.s32 0, %v221
    %v223 = vrot.slane %v163, %v222
    %v225 = vadd.f32 %v215, %v223
    %v226 = vadd.f32 %v216, %v223
    %v227 = vadd.f32 %v217, %v223
    %v228 = vadd.f32 %v218, %v223
    %v229 = vld [vmem:[%s6] sm:$0xff]
    %v230 = vld [vmem:[%s6 + $0x8] sm:$0xff]
    %v231 = vld [vmem:[%s6 + $0x10] sm:$0xff]
    %v232 = vld [vmem:[%s6 + $0x18] sm:$0xff]
    %v233 = vld [vmem:[%s6 + $0x20] sm:$0xff]
    %v234 = vld [vmem:[%s6 + $0x28] sm:$0xff]
    %v235 = vld [vmem:[%s6 + $0x30] sm:$0xff]
    %v236 = vld [vmem:[%s6 + $0x38] sm:$0xff]
    %v237 = vld [vmem:[%s6 + $0x40] sm:$0xff]
    %v238 = vld [vmem:[%s6 + $0x48] sm:$0xff]
    %v239 = vld [vmem:[%s6 + $0x50] sm:$0xff]
    %v240 = vld [vmem:[%s6 + $0x58] sm:$0xff]
    %v241 = vld [vmem:[%s6 + $0x60] sm:$0xff]
    %v242 = vld [vmem:[%s6 + $0x68] sm:$0xff]
    %v243 = vld [vmem:[%s6 + $0x70] sm:$0xff]
    %v244 = vld [vmem:[%s6 + $0x78] sm:$0xff]
    %v245 = vld [vmem:[%s7] sm:$0x1]
    %v247 = vlaneseq
    %v248 = vshrl.u32 %v247, 7
    %v249 = vsub.s32 0, %v248
    %v250 = vrot.slane %v245, %v249
    %252 = vmatprep.subr.mxu0 0.0
    %253 = vmatpush1.msra.mxu0 %v229
    %254 = vmatprep.subr.mxu0 0.0
    %255 = vmatpush1.msra.mxu0 %v230
    %256 = vmatprep.subr.mxu0 0.0
    %257 = vmatpush1.msra.mxu0 %v231
    %258 = vmatprep.subr.mxu0 0.0
    %259 = vmatpush1.msra.mxu0 %v232
    %260 = vmatprep.subr.mxu0 0.0
    %261 = vmatpush1.msra.mxu0 %v233
    %262 = vmatprep.subr.mxu0 0.0
    %263 = vmatpush1.msra.mxu0 %v234
    %264 = vmatprep.subr.mxu0 0.0
    %265 = vmatpush1.msra.mxu0 %v235
    %266 = vmatprep.subr.mxu0 0.0
    %267 = vmatpush1.msra.mxu0 %v236
    %268 = vmatprep.subr.mxu0 0.0
    %269 = vmatpush1.msra.mxu0 %v237
    %270 = vmatprep.subr.mxu0 0.0
    %271 = vmatpush1.msra.mxu0 %v238
    %272 = vmatprep.subr.mxu0 0.0
    %273 = vmatpush1.msra.mxu0 %v239
    %274 = vmatprep.subr.mxu0 0.0
    %275 = vmatpush1.msra.mxu0 %v240
    %276 = vmatprep.subr.mxu0 0.0
    %277 = vmatpush1.msra.mxu0 %v241
    %278 = vmatprep.subr.mxu0 0.0
    %279 = vmatpush1.msra.mxu0 %v242
    %280 = vmatprep.subr.mxu0 0.0
    %281 = vmatpush1.msra.mxu0 %v243
    %282 = vmatprep.subr.mxu0 0.0
    %283 = vmatpush1.msra.mxu0 %v244
    %284 = vmatprep.subr.mxu0 0.0
    %285 = vmatpush1.msra.mxu0 0.0
    %286 = vmatprep.subr.mxu0 0.0
    %287 = vmatpush1.msra.mxu0 0.0
    %288 = vmatprep.subr.mxu0 0.0
    %289 = vmatpush1.msra.mxu0 0.0
    %290 = vmatprep.subr.mxu0 0.0
    %291 = vmatpush1.msra.mxu0 0.0
    %292 = vmatprep.subr.mxu0 0.0
    %293 = vmatpush1.msra.mxu0 0.0
    %294 = vmatprep.subr.mxu0 0.0
    %295 = vmatpush1.msra.mxu0 0.0
    %296 = vmatprep.subr.mxu0 0.0
    %297 = vmatpush1.msra.mxu0 0.0
    %298 = vmatprep.subr.mxu0 0.0
    %299 = vmatpush1.msra.mxu0 0.0
    %300 = vmatprep.subr.mxu0 0.0
    %301 = vmatpush1.msra.mxu0 0.0
    %302 = vmatprep.subr.mxu0 0.0
    %303 = vmatpush1.msra.mxu0 0.0
    %304 = vmatprep.subr.mxu0 0.0
    %305 = vmatpush1.msra.mxu0 0.0
    %306 = vmatprep.subr.mxu0 0.0
    %307 = vmatpush1.msra.mxu0 0.0
    %308 = vmatprep.subr.mxu0 0.0
    %309 = vmatpush1.msra.mxu0 0.0
    %310 = vmatprep.subr.mxu0 0.0
    %311 = vmatpush1.msra.mxu0 0.0
    %312 = vmatprep.subr.mxu0 0.0
    %313 = vmatpush1.msra.mxu0 0.0
    %314 = vmatprep.subr.mxu0 0.0
    %315 = vmatpush1.msra.mxu0 0.0
    %316 = vmatprep.mubr.f32.mxu0 0.0
    %317 = vmatmul.mubr.f32.gmra.mrb[0].mxu0 %v225
    %v318 = vpop.f32.mrb[0].mxu0
    %v319 = vadd.f32 %v250, %v318
    %v320 = vpop.f32.mrb[0].mxu0
    %321 = vmatprep.mubr.f32.mxu0 0.0
    %322 = vmatmul.mubr.f32.gmra.mrb[0].mxu0 %v226
    %v323 = vpop.f32.mrb[0].mxu0
    %v324 = vadd.f32 %v250, %v323
    %v325 = vpop.f32.mrb[0].mxu0
    %326 = vmatprep.mubr.f32.mxu0 0.0
    %327 = vmatmul.mubr.f32.gmra.mrb[0].mxu0 %v227
    %v328 = vpop.f32.mrb[0].mxu0
    %v329 = vadd.f32 %v250, %v328
    %v330 = vpop.f32.mrb[0].mxu0
    %331 = vmatprep.mubr.f32.mxu0 0.0
    %332 = vmatmul.mubr.f32.gmra.mrb[0].mxu0 %v228
    %v333 = vpop.f32.mrb[0].mxu0
    %v334 = vadd.f32 %v250, %v333
    %v335 = vpop.f32.mrb[0].mxu0
    %336 = vdwg.mxu0
    %v337 = vmul.f32 %v319, 0.5
    %v338 = vmul.f32 %v324, 0.5
    %v339 = vmul.f32 %v329, 0.5
    %v340 = vmul.f32 %v334, 0.5
    %v341 = vmul.f32 %v319, 0.70710677
    %v342 = vmul.f32 %v324, 0.70710677
    %v343 = vmul.f32 %v329, 0.70710677
    %v344 = vmul.f32 %v334, 0.70710677
    %vm345 = vcmp.lt.f32.partialorder %v341, 0.0
    %vm346 = vcmp.lt.f32.partialorder %v342, 0.0
    %vm347 = vcmp.lt.f32.partialorder %v343, 0.0
    %vm348 = vcmp.lt.f32.partialorder %v344, 0.0
    %v349 = vsub.f32 0.0, %v341
    %v350 = vsub.f32 0.0, %v342
    %v351 = vsub.f32 0.0, %v343
    %v352 = vsub.f32 0.0, %v344
    %v353 = vsel %vm345, %v349, %v341
    %v354 = vsel %vm346, %v350, %v342
    %v355 = vsel %vm347, %v351, %v343
    %v356 = vsel %vm348, %v352, %v344
    %v357 = vmul.f32 %v353, 0.3275911
    %v358 = vmul.f32 %v354, 0.3275911
    %v359 = vmul.f32 %v355, 0.3275911
    %v360 = vmul.f32 %v356, 0.3275911
    %v361 = vadd.f32 %v357, 1.0
    %v362 = vadd.f32 %v358, 1.0
    %v363 = vadd.f32 %v359, 1.0
    %v364 = vadd.f32 %v360, 1.0
    %v365 = vrcp.pop %v361
    %v366 = vmul.f32 1.0, %v365
    %v367 = vrcp.pop %v362
    %v368 = vmul.f32 1.0, %v367
    %v369 = vrcp.pop %v363
    %v370 = vmul.f32 1.0, %v369
    %v371 = vrcp.pop %v364
    %v372 = vmul.f32 1.0, %v371
    %v373 = vmul.f32 %v366, 1.0614054
    %v374 = vmul.f32 %v368, 1.0614054
    %v375 = vmul.f32 %v370, 1.0614054
    %v376 = vmul.f32 %v372, 1.0614054
    %v377 = vadd.f32 %v373, -1.4531521
    %v378 = vadd.f32 %v374, -1.4531521
    %v379 = vadd.f32 %v375, -1.4531521
    %v380 = vadd.f32 %v376, -1.4531521
    %v381 = vmul.f32 %v377, %v366
    %v382 = vmul.f32 %v378, %v368
    %v383 = vmul.f32 %v379, %v370
    %v384 = vmul.f32 %v380, %v372
    %v385 = vadd.f32 %v381, 1.4214138
    %v386 = vadd.f32 %v382, 1.4214138
    %v387 = vadd.f32 %v383, 1.4214138
    %v388 = vadd.f32 %v384, 1.4214138
    %v389 = vmul.f32 %v385, %v366
    %v390 = vmul.f32 %v386, %v368
    %v391 = vmul.f32 %v387, %v370
    %v392 = vmul.f32 %v388, %v372
    %v393 = vadd.f32 %v389, -0.28449672
    %v394 = vadd.f32 %v390, -0.28449672
    %v395 = vadd.f32 %v391, -0.28449672
    %v396 = vadd.f32 %v392, -0.28449672
    %v397 = vmul.f32 %v393, %v366
    %v398 = vmul.f32 %v394, %v368
    %v399 = vmul.f32 %v395, %v370
    %v400 = vmul.f32 %v396, %v372
    %v401 = vadd.f32 %v397, 0.2548296
    %v402 = vadd.f32 %v398, 0.2548296
    %v403 = vadd.f32 %v399, 0.2548296
    %v404 = vadd.f32 %v400, 0.2548296
    %v405 = vmul.f32 %v401, %v366
    %v406 = vmul.f32 %v402, %v368
    %v407 = vmul.f32 %v403, %v370
    %v408 = vmul.f32 %v404, %v372
    %v409 = vsub.f32 0.0, %v353
    %v410 = vsub.f32 0.0, %v354
    %v411 = vsub.f32 0.0, %v355
    %v412 = vsub.f32 0.0, %v356
    %v413 = vmul.f32 %v409, %v353
    %v414 = vmul.f32 %v410, %v354
    %v415 = vmul.f32 %v411, %v355
    %v416 = vmul.f32 %v412, %v356
    %v417 = vmul.f32 %v413, 1.442695
    %v418 = vpow.pop %v417
    %v419 = vmul.f32 %v414, 1.442695
    %v420 = vpow.pop %v419
    %v421 = vmul.f32 %v415, 1.442695
    %v422 = vpow.pop %v421
    %v423 = vmul.f32 %v416, 1.442695
    %v424 = vpow.pop %v423
    %v425 = vmul.f32 %v405, %v418
    %v426 = vmul.f32 %v406, %v420
    %v427 = vmul.f32 %v407, %v422
    %v428 = vmul.f32 %v408, %v424
    %v429 = vsub.f32 1.0, %v425
    %v430 = vsub.f32 1.0, %v426
    %v431 = vsub.f32 1.0, %v427
    %v432 = vsub.f32 1.0, %v428
    %v433 = vsub.f32 0.0, %v429
    %v434 = vsub.f32 0.0, %v430
    %v435 = vsub.f32 0.0, %v431
    %v436 = vsub.f32 0.0, %v432
    %v437 = vsel %vm345, %v433, %v429
    %v438 = vsel %vm346, %v434, %v430
    %v439 = vsel %vm347, %v435, %v431
    %v440 = vsel %vm348, %v436, %v432
    %v441 = vadd.f32 %v437, 1.0
    %v442 = vadd.f32 %v438, 1.0
    %v443 = vadd.f32 %v439, 1.0
    %v444 = vadd.f32 %v440, 1.0
    %v445 = vmul.f32 %v337, %v441
    %v446 = vmul.f32 %v338, %v442
    %v447 = vmul.f32 %v339, %v443
    %v448 = vmul.f32 %v340, %v444
    %v449 = vld [vmem:[%s8] sm:$0xff]
    %v450 = vld [vmem:[%s8 + $0x8] sm:$0xff]
    %v451 = vld [vmem:[%s8 + $0x10] sm:$0xff]
    %v452 = vld [vmem:[%s8 + $0x18] sm:$0xff]
    %v453 = vld [vmem:[%s8 + $0x20] sm:$0xff]
    %v454 = vld [vmem:[%s8 + $0x28] sm:$0xff]
    %v455 = vld [vmem:[%s8 + $0x30] sm:$0xff]
    %v456 = vld [vmem:[%s8 + $0x38] sm:$0xff]
    %v457 = vld [vmem:[%s8 + $0x40] sm:$0xff]
    %v458 = vld [vmem:[%s8 + $0x48] sm:$0xff]
    %v459 = vld [vmem:[%s8 + $0x50] sm:$0xff]
    %v460 = vld [vmem:[%s8 + $0x58] sm:$0xff]
    %v461 = vld [vmem:[%s8 + $0x60] sm:$0xff]
    %v462 = vld [vmem:[%s8 + $0x68] sm:$0xff]
    %v463 = vld [vmem:[%s8 + $0x70] sm:$0xff]
    %v464 = vld [vmem:[%s8 + $0x78] sm:$0xff]
    %v465 = vld [vmem:[%s9] sm:$0x1]
    %v467 = vlaneseq
    %v468 = vshrl.u32 %v467, 7
    %v469 = vsub.s32 0, %v468
    %v470 = vrot.slane %v465, %v469
    %472 = vmatprep.subr.mxu0 0.0
    %473 = vmatpush1.msra.mxu0 %v449
    %474 = vmatprep.subr.mxu0 0.0
    %475 = vmatpush1.msra.mxu0 %v450
    %476 = vmatprep.subr.mxu0 0.0
    %477 = vmatpush1.msra.mxu0 %v451
    %478 = vmatprep.subr.mxu0 0.0
    %479 = vmatpush1.msra.mxu0 %v452
    %480 = vmatprep.subr.mxu0 0.0
    %481 = vmatpush1.msra.mxu0 %v453
    %482 = vmatprep.subr.mxu0 0.0
    %483 = vmatpush1.msra.mxu0 %v454
    %484 = vmatprep.subr.mxu0 0.0
    %485 = vmatpush1.msra.mxu0 %v455
    %486 = vmatprep.subr.mxu0 0.0
    %487 = vmatpush1.msra.mxu0 %v456
    %488 = vmatprep.subr.mxu0 0.0
    %489 = vmatpush1.msra.mxu0 %v457
    %490 = vmatprep.subr.mxu0 0.0
    %491 = vmatpush1.msra.mxu0 %v458
    %492 = vmatprep.subr.mxu0 0.0
    %493 = vmatpush1.msra.mxu0 %v459
    %494 = vmatprep.subr.mxu0 0.0
    %495 = vmatpush1.msra.mxu0 %v460
    %496 = vmatprep.subr.mxu0 0.0
    %497 = vmatpush1.msra.mxu0 %v461
    %498 = vmatprep.subr.mxu0 0.0
    %499 = vmatpush1.msra.mxu0 %v462
    %500 = vmatprep.subr.mxu0 0.0
    %501 = vmatpush1.msra.mxu0 %v463
    %502 = vmatprep.subr.mxu0 0.0
    %503 = vmatpush1.msra.mxu0 %v464
    %504 = vmatprep.subr.mxu0 0.0
    %505 = vmatpush1.msra.mxu0 0.0
    %506 = vmatprep.subr.mxu0 0.0
    %507 = vmatpush1.msra.mxu0 0.0
    %508 = vmatprep.subr.mxu0 0.0
    %509 = vmatpush1.msra.mxu0 0.0
    %510 = vmatprep.subr.mxu0 0.0
    %511 = vmatpush1.msra.mxu0 0.0
    %512 = vmatprep.subr.mxu0 0.0
    %513 = vmatpush1.msra.mxu0 0.0
    %514 = vmatprep.subr.mxu0 0.0
    %515 = vmatpush1.msra.mxu0 0.0
    %516 = vmatprep.subr.mxu0 0.0
    %517 = vmatpush1.msra.mxu0 0.0
    %518 = vmatprep.subr.mxu0 0.0
    %519 = vmatpush1.msra.mxu0 0.0
    %520 = vmatprep.subr.mxu0 0.0
    %521 = vmatpush1.msra.mxu0 0.0
    %522 = vmatprep.subr.mxu0 0.0
    %523 = vmatpush1.msra.mxu0 0.0
    %524 = vmatprep.subr.mxu0 0.0
    %525 = vmatpush1.msra.mxu0 0.0
    %526 = vmatprep.subr.mxu0 0.0
    %527 = vmatpush1.msra.mxu0 0.0
    %528 = vmatprep.subr.mxu0 0.0
    %529 = vmatpush1.msra.mxu0 0.0
    %530 = vmatprep.subr.mxu0 0.0
    %531 = vmatpush1.msra.mxu0 0.0
    %532 = vmatprep.subr.mxu0 0.0
    %533 = vmatpush1.msra.mxu0 0.0
    %534 = vmatprep.subr.mxu0 0.0
    %535 = vmatpush1.msra.mxu0 0.0
    %536 = vmatprep.mubr.f32.mxu0 0.0
    %537 = vmatmul.mubr.f32.gmra.mrb[0].mxu0 %v445
    %v538 = vpop.f32.mrb[0].mxu0
    %v539 = vadd.f32 %v470, %v538
    %v540 = vpop.f32.mrb[0].mxu0
    %541 = vmatprep.mubr.f32.mxu0 0.0
    %542 = vmatmul.mubr.f32.gmra.mrb[0].mxu0 %v446
    %v543 = vpop.f32.mrb[0].mxu0
    %v544 = vadd.f32 %v470, %v543
    %v545 = vpop.f32.mrb[0].mxu0
    %546 = vmatprep.mubr.f32.mxu0 0.0
    %547 = vmatmul.mubr.f32.gmra.mrb[0].mxu0 %v447
    %v548 = vpop.f32.mrb[0].mxu0
    %v549 = vadd.f32 %v470, %v548
    %v550 = vpop.f32.mrb[0].mxu0
    %551 = vmatprep.mubr.f32.mxu0 0.0
    %552 = vmatmul.mubr.f32.gmra.mrb[0].mxu0 %v448
    %v553 = vpop.f32.mrb[0].mxu0
    %v554 = vadd.f32 %v470, %v553
    %v555 = vpop.f32.mrb[0].mxu0
    %556 = vdwg.mxu0
    %v557 = vld [vmem:[%s10] sm:$0x1]
    %v558 = vld [vmem:[%s11] sm:$0x1]
    %559 = vadd.xlane.f32.xlu0 %v539
    %v560 = vpop.xlane.xlu0 %559
    %561 = vadd.xlane.f32.xlu0 %v544
    %v562 = vpop.xlane.xlu0 %561
    %563 = vadd.xlane.f32.xlu0 %v549
    %v564 = vpop.xlane.xlu0 %563
    %565 = vadd.xlane.f32.xlu0 %v554
    %v566 = vpop.xlane.xlu0 %565
    %v567 = vmul.f32 %v560, %v172
    %v568 = vmul.f32 %v562, %v172
    %v569 = vmul.f32 %v564, %v172
    %v570 = vmul.f32 %v566, %v172
    %v571 = vsub.f32 %v539, %v567
    %v572 = vsub.f32 %v544, %v568
    %v573 = vsub.f32 %v549, %v569
    %v574 = vsub.f32 %v554, %v570
    %v575 = vmul.f32 %v571, %v571
    %v576 = vmul.f32 %v572, %v572
    %v577 = vmul.f32 %v573, %v573
    %v578 = vmul.f32 %v574, %v574
    %579 = vadd.xlane.f32.xlu0 %v575
    %v580 = vpop.xlane.xlu0 %579
    %581 = vadd.xlane.f32.xlu0 %v576
    %v582 = vpop.xlane.xlu0 %581
    %583 = vadd.xlane.f32.xlu0 %v577
    %v584 = vpop.xlane.xlu0 %583
    %585 = vadd.xlane.f32.xlu0 %v578
    %v586 = vpop.xlane.xlu0 %585
    %v587 = vmul.f32 %v580, %v172
    %v588 = vmul.f32 %v582, %v172
    %v589 = vmul.f32 %v584, %v172
    %v590 = vmul.f32 %v586, %v172
    %v591 = vadd.f32 %v587, 1e-05
    %v592 = vadd.f32 %v588, 1e-05
    %v593 = vadd.f32 %v589, 1e-05
    %v594 = vadd.f32 %v590, 1e-05
    %v595 = vrsqrt.pop %v591
    %v596 = vrsqrt.pop %v592
    %v597 = vrsqrt.pop %v593
    %v598 = vrsqrt.pop %v594
    %v599 = vmul.f32 %v571, %v595
    %v600 = vmul.f32 %v572, %v596
    %v601 = vmul.f32 %v573, %v597
    %v602 = vmul.f32 %v574, %v598
    %v604 = vlaneseq
    %v605 = vshrl.u32 %v604, 7
    %v606 = vsub.s32 0, %v605
    %v607 = vrot.slane %v557, %v606
    %v609 = vmul.f32 %v599, %v607
    %v610 = vmul.f32 %v600, %v607
    %v611 = vmul.f32 %v601, %v607
    %v612 = vmul.f32 %v602, %v607
    %v614 = vlaneseq
    %v615 = vshrl.u32 %v614, 7
    %v616 = vsub.s32 0, %v615
    %v617 = vrot.slane %v558, %v616
    %v619 = vadd.f32 %v609, %v617
    %v620 = vadd.f32 %v610, %v617
    %v621 = vadd.f32 %v611, %v617
    %v622 = vadd.f32 %v612, %v617
    %v623 = vadd.f32 %v225, %v619
    %v624 = vadd.f32 %v226, %v620
    %v625 = vadd.f32 %v227, %v621
    %v626 = vadd.f32 %v228, %v622
    %627 = vst [vmem:[#allocation2] sm:$0xff] %v623
    %628 = vst [vmem:[#allocation2 + $0x8] sm:$0xff] %v624
    %629 = vst [vmem:[#allocation2 + $0x10] sm:$0xff] %v625
    %630 = vst [vmem:[#allocation2 + $0x18] sm:$0xff] %v626
    // Predicated region
    $region50: #{encoder_forward.5} parent=1 // pred_check
      _
    $region51: #{encoder_forward.5} parent=1 // pred_check_branch
      %632 = sbr.rel (0) target = $region53
    $region52: #{encoder_forward.5} parent=1 // pred_region
      %s634 = ssub.s32 512, 512
      %635 = vsyncadd [#allocation3], %s634
      %s636 = sshll.u32 [#allocation2], 4
      %s637 = int_to_ptr.vmem [resolvable:$true] %s636
      %642 = dma.vmem_to_hbm [thread:$0]  %s637, 512, %s12, [#allocation3], 128, 128, 8
    $region53: #{encoder_forward.5} parent=1 // pred_fallthru
      _
    // Predicated region
    $region54: #{encoder_forward.5} parent=1 // pred_check
      _
    $region55: #{encoder_forward.5} parent=1 // pred_check_branch
      %644 = sbr.rel (0) target = $region57
    $region56: #{encoder_forward.5} parent=1 // pred_region
      %645 = dma.done [#allocation3], 512
    $region57: #{encoder_forward.5} parent=1 // pred_fallthru
      _
    %646 = vsyncpa [#allocation3], 1

// kernel: encoder_forward.4
$region0: #{encoder_forward.4}
  #allocation0 [shape = 'u32[]', space=smem, size = 0x4, offset = 0x4, fixed_abs, tag = 'smem constant byte address 0x4 - core index']
  #allocation1 [shape = 'u32[144,128]{1,0:T(1,128)}', space=vmem, size = 0x12000, scoped, tag = 'internal scratch']
  %s0 = inlined_call_operand.vmem [shape: f32[8,16,32], index: 0, kind: input, shape index: {}]
  %s1 = inlined_call_operand.vmem [shape: f32[8,16,32], index: 1, kind: input, shape index: {}]
  %s2 = inlined_call_operand.vmem [shape: f32[8,16,32], index: 2, kind: input, shape index: {}]
  %s3 = inlined_call_operand.vmem [shape: f32[8,16,32], index: 3, kind: output, shape index: {}]
  %s4 = sld [smem:[#allocation0]]
  $region22: #{encoder_forward.4} parent=0
    _
  %s6 = ssub.s32 1, %s4
  %s7 = scalar_select 0, %s6, %s4
  // Predicated region
  $region2: #{encoder_forward.4} parent=0 // pred_check
    _
  $region3: #{encoder_forward.4} parent=0 // pred_check_branch
    %9 = sbr.rel (0) target = $region5
  $region4: #{encoder_forward.4} parent=0 // pred_region
    _
  $region5: #{encoder_forward.4} parent=0 // pred_fallthru
    _
  // Predicated region
  $region6: #{encoder_forward.4} parent=0 // pred_check
    _
  $region7: #{encoder_forward.4} parent=0 // pred_check_branch
    %11 = sbr.rel (0) target = $region9
  $region8: #{encoder_forward.4} parent=0 // pred_region
    _
  $region9: #{encoder_forward.4} parent=0 // pred_fallthru
    _
  // Predicated region
  $region10: #{encoder_forward.4} parent=0 // pred_check
    _
  $region11: #{encoder_forward.4} parent=0 // pred_check_branch
    %13 = sbr.rel (0) target = $region13
  $region12: #{encoder_forward.4} parent=0 // pred_region
    _
  $region13: #{encoder_forward.4} parent=0 // pred_fallthru
    _
  %v14 = vld [vmem:[%s0] sm:$0xff]
  %v15 = vld [vmem:[%s0 + $0x8] sm:$0xff]
  %v16 = vld [vmem:[%s0 + $0x10] sm:$0xff]
  %v17 = vld [vmem:[%s0 + $0x18] sm:$0xff]
  %v18 = vld [vmem:[%s0 + $0x20] sm:$0xff]
  %v19 = vld [vmem:[%s0 + $0x28] sm:$0xff]
  %v20 = vld [vmem:[%s0 + $0x30] sm:$0xff]
  %v21 = vld [vmem:[%s0 + $0x38] sm:$0xff]
  %v22 = vld [vmem:[%s0 + $0x40] sm:$0xff]
  %v23 = vld [vmem:[%s0 + $0x48] sm:$0xff]
  %v24 = vld [vmem:[%s0 + $0x50] sm:$0xff]
  %v25 = vld [vmem:[%s0 + $0x58] sm:$0xff]
  %v26 = vld [vmem:[%s0 + $0x60] sm:$0xff]
  %v27 = vld [vmem:[%s0 + $0x68] sm:$0xff]
  %v28 = vld [vmem:[%s0 + $0x70] sm:$0xff]
  %v29 = vld [vmem:[%s0 + $0x78] sm:$0xff]
  %v30 = vld [vmem:[%s1] sm:$0xff]
  %v31 = vld [vmem:[%s1 + $0x8] sm:$0xff]
  %v32 = vld [vmem:[%s1 + $0x10] sm:$0xff]
  %v33 = vld [vmem:[%s1 + $0x18] sm:$0xff]
  %v34 = vld [vmem:[%s1 + $0x20] sm:$0xff]
  %v35 = vld [vmem:[%s1 + $0x28] sm:$0xff]
  %v36 = vld [vmem:[%s1 + $0x30] sm:$0xff]
  %v37 = vld [vmem:[%s1 + $0x38] sm:$0xff]
  %v38 = vld [vmem:[%s1 + $0x40] sm:$0xff]
  %v39 = vld [vmem:[%s1 + $0x48] sm:$0xff]
  %v40 = vld [vmem:[%s1 + $0x50] sm:$0xff]
  %v41 = vld [vmem:[%s1 + $0x58] sm:$0xff]
  %v42 = vld [vmem:[%s1 + $0x60] sm:$0xff]
  %v43 = vld [vmem:[%s1 + $0x68] sm:$0xff]
  %v44 = vld [vmem:[%s1 + $0x70] sm:$0xff]
  %v45 = vld [vmem:[%s1 + $0x78] sm:$0xff]
  %v46 = vld [vmem:[%s2] sm:$0xff]
  %v47 = vld [vmem:[%s2 + $0x8] sm:$0xff]
  %v48 = vld [vmem:[%s2 + $0x10] sm:$0xff]
  %v49 = vld [vmem:[%s2 + $0x18] sm:$0xff]
  %v50 = vld [vmem:[%s2 + $0x20] sm:$0xff]
  %v51 = vld [vmem:[%s2 + $0x28] sm:$0xff]
  %v52 = vld [vmem:[%s2 + $0x30] sm:$0xff]
  %v53 = vld [vmem:[%s2 + $0x38] sm:$0xff]
  %v54 = vld [vmem:[%s2 + $0x40] sm:$0xff]
  %v55 = vld [vmem:[%s2 + $0x48] sm:$0xff]
  %v56 = vld [vmem:[%s2 + $0x50] sm:$0xff]
  %v57 = vld [vmem:[%s2 + $0x58] sm:$0xff]
  %v58 = vld [vmem:[%s2 + $0x60] sm:$0xff]
  %v59 = vld [vmem:[%s2 + $0x68] sm:$0xff]
  %v60 = vld [vmem:[%s2 + $0x70] sm:$0xff]
  %v61 = vld [vmem:[%s2 + $0x78] sm:$0xff]
  %vm62 = vcmask 261120
  %v64 = vsel %vm62, %v14, 0
  %v67 = vsel %vm62, %v15, 0
  %v70 = vsel %vm62, %v30, 0
  %v73 = vsel %vm62, %v31, 0
  %75 = vmatprep.subr.mxu0 0.0
  %76 = vmatpush1.xpose.msra.mxu0 %v70
  %77 = vmatprep.subr.mxu0 0.0
  %78 = vmatpush1.xpose.msra.mxu0 %v73
  %79 = vmatprep.subr.mxu0 0.0
  %80 = vmatpush1.xpose.msra.mxu0 0.0
  %81 = vmatprep.subr.mxu0 0.0
  %82 = vmatpush1.xpose.msra.mxu0 0.0
  %83 = vmatprep.subr.mxu0 0.0
  %84 = vmatpush1.xpose.msra.mxu0 0.0
  %85 = vmatprep.subr.mxu0 0.0
  %86 = vmatpush1.xpose.msra.mxu0 0.0
  %87 = vmatprep.subr.mxu0 0.0
  %88 = vmatpush1.xpose.msra.mxu0 0.0
  %89 = vmatprep.subr.mxu0 0.0
  %90 = vmatpush1.xpose.msra.mxu0 0.0
  %91 = vmatprep.subr.mxu0 0.0
  %92 = vmatpush1.xpose.msra.mxu0 0.0
  %93 = vmatprep.subr.mxu0 0.0
  %94 = vmatpush1.xpose.msra.mxu0 0.0
  %95 = vmatprep.subr.mxu0 0.0
  %96 = vmatpush1.xpose.msra.mxu0 0.0
  %97 = vmatprep.subr.mxu0 0.0
  %98 = vmatpush1.xpose.msra.mxu0 0.0
  %99 = vmatprep.subr.mxu0 0.0
  %100 = vmatpush1.xpose.msra.mxu0 0.0
  %101 = vmatprep.subr.mxu0 0.0
  %102 = vmatpush1.xpose.msra.mxu0 0.0
  %103 = vmatprep.subr.mxu0 0.0
  %104 = vmatpush1.xpose.msra.mxu0 0.0
  %105 = vmatprep.subr.mxu0 0.0
  %106 = vmatpush1.xpose.msra.mxu0 0.0
  %107 = vmatprep.subr.mxu0 0.0
  %108 = vmatpush1.xpose.msra.mxu0 0.0
  %109 = vmatprep.subr.mxu0 0.0
  %110 = vmatpush1.xpose.msra.mxu0 0.0
  %111 = vmatprep.subr.mxu0 0.0
  %112 = vmatpush1.xpose.msra.mxu0 0.0
  %113 = vmatprep.subr.mxu0 0.0
  %114 = vmatpush1.xpose.msra.mxu0 0.0
  %115 = vmatprep.subr.mxu0 0.0
  %116 = vmatpush1.xpose.msra.mxu0 0.0
  %117 = vmatprep.subr.mxu0 0.0
  %118 = vmatpush1.xpose.msra.mxu0 0.0
  %119 = vmatprep.subr.mxu0 0.0
  %120 = vmatpush1.xpose.msra.mxu0 0.0
  %121 = vmatprep.subr.mxu0 0.0
  %122 = vmatpush1.xpose.msra.mxu0 0.0
  %123 = vmatprep.subr.mxu0 0.0
  %124 = vmatpush1.xpose.msra.mxu0 0.0
  %125 = vmatprep.subr.mxu0 0.0
  %126 = vmatpush1.xpose.msra.mxu0 0.0
  %127 = vmatprep.subr.mxu0 0.0
  %128 = vmatpush1.xpose.msra.mxu0 0.0
  %129 = vmatprep.subr.mxu0 0.0
  %130 = vmatpush1.xpose.msra.mxu0 0.0
  %131 = vmatprep.subr.mxu0 0.0
  %132 = vmatpush1.xpose.msra.mxu0 0.0
  %133 = vmatprep.subr.mxu0 0.0
  %134 = vmatpush1.xpose.msra.mxu0 0.0
  %135 = vmatprep.subr.mxu0 0.0
  %136 = vmatpush1.xpose.msra.mxu0 0.0
  %137 = vmatprep.subr.mxu0 0.0
  %138 = vmatpush1.xpose.msra.mxu0 0.0
  %139 = vmatprep.mubr.f32.mxu0 0.0
  %140 = vmatmul.mubr.f32.gmra.mrb[0].mxu0 %v64
  %v141 = vpop.f32.mrb[0].mxu0
  %v142 = vadd.f32 0.0, %v141
  %v143 = vpop.f32.mrb[0].mxu0
  %144 = vmatprep.mubr.f32.mxu0 0.0
  %145 = vmatmul.mubr.f32.gmra.mrb[0].mxu0 %v67
  %v146 = vpop.f32.mrb[0].mxu0
  %v147 = vadd.f32 0.0, %v146
  %v148 = vpop.f32.mrb[0].mxu0
  %149 = vdwg.mxu0
  %v151 = vsel %vm62, %v16, 0
  %v154 = vsel %vm62, %v17, 0
  %v157 = vsel %vm62, %v32, 0
  %v160 = vsel %vm62, %v33, 0
  %162 = vmatprep.subr.mxu0 0.0
  %163 = vmatpush1.xpose.msra.mxu0 %v157
  %164 = vmatprep.subr.mxu0 0.0
  %165 = vmatpush1.xpose.msra.mxu0 %v160
  %166 = vmatprep.subr.mxu0 0.0
  %167 = vmatpush1.xpose.msra.mxu0 0.0
  %168 = vmatprep.subr.mxu0 0.0
  %169 = vmatpush1.xpose.msra.mxu0 0.0
  %170 = vmatprep.subr.mxu0 0.0
  %171 = vmatpush1.xpose.msra.mxu0 0.0
  %172 = vmatprep.subr.mxu0 0.0
  %173 = vmatpush1.xpose.msra.mxu0 0.0
  %174 = vmatprep.subr.mxu0 0.0
  %175 = vmatpush1.xpose.msra.mxu0 0.0
  %176 = vmatprep.subr.mxu0 0.0
  %177 = vmatpush1.xpose.msra.mxu0 0.0
  %178 = vmatprep.subr.mxu0 0.0
  %179 = vmatpush1.xpose.msra.mxu0 0.0
  %180 = vmatprep.subr.mxu0 0.0
  %181 = vmatpush1.xpose.msra.mxu0 0.0
  %182 = vmatprep.subr.mxu0 0.0
  %183 = vmatpush1.xpose.msra.mxu0 0.0
  %184 = vmatprep.subr.mxu0 0.0
  %185 = vmatpush1.xpose.msra.mxu0 0.0
  %186 = vmatprep.subr.mxu0 0.0
  %187 = vmatpush1.xpose.msra.mxu0 0.0
  %188 = vmatprep.subr.mxu0 0.0
  %189 = vmatpush1.xpose.msra.mxu0 0.0
  %190 = vmatprep.subr.mxu0 0.0
  %191 = vmatpush1.xpose.msra.mxu0 0.0
  %192 = vmatprep.subr.mxu0 0.0
  %193 = vmatpush1.xpose.msra.mxu0 0.0
  %194 = vmatprep.subr.mxu0 0.0
  %195 = vmatpush1.xpose.msra.mxu0 0.0
  %196 = vmatprep.subr.mxu0 0.0
  %197 = vmatpush1.xpose.msra.mxu0 0.0
  %198 = vmatprep.subr.mxu0 0.0
  %199 = vmatpush1.xpose.msra.mxu0 0.0
  %200 = vmatprep.subr.mxu0 0.0
  %201 = vmatpush1.xpose.msra.mxu0 0.0
  %202 = vmatprep.subr.mxu0 0.0
  %203 = vmatpush1.xpose.msra.mxu0 0.0
  %204 = vmatprep.subr.mxu0 0.0
  %205 = vmatpush1.xpose.msra.mxu0 0.0
  %206 = vmatprep.subr.mxu0 0.0
  %207 = vmatpush1.xpose.msra.mxu0 0.0
  %208 = vmatprep.subr.mxu0 0.0
  %209 = vmatpush1.xpose.msra.mxu0 0.0
  %210 = vmatprep.subr.mxu0 0.0
  %211 = vmatpush1.xpose.msra.mxu0 0.0
  %212 = vmatprep.subr.mxu0 0.0
  %213 = vmatpush1.xpose.msra.mxu0 0.0
  %214 = vmatprep.subr.mxu0 0.0
  %215 = vmatpush1.xpose.msra.mxu0 0.0
  %216 = vmatprep.subr.mxu0 0.0
  %217 = vmatpush1.xpose.msra.mxu0 0.0
  %218 = vmatprep.subr.mxu0 0.0
  %219 = vmatpush1.xpose.msra.mxu0 0.0
  %220 = vmatprep.subr.mxu0 0.0
  %221 = vmatpush1.xpose.msra.mxu0 0.0
  %222 = vmatprep.subr.mxu0 0.0
  %223 = vmatpush1.xpose.msra.mxu0 0.0
  %224 = vmatprep.subr.mxu0 0.0
  %225 = vmatpush1.xpose.msra.mxu0 0.0
  %226 = vmatprep.mubr.f32.mxu0 0.0
  %227 = vmatmul.mubr.f32.gmra.mrb[0].mxu0 %v151
  %v228 = vpop.f32.mrb[0].mxu0
  %v229 = vadd.f32 0.0, %v228
  %v230 = vpop.f32.mrb[0].mxu0
  %231 = vmatprep.mubr.f32.mxu0 0.0
  %232 = vmatmul.mubr.f32.gmra.mrb[0].mxu0 %v154
  %v233 = vpop.f32.mrb[0].mxu0
  %v234 = vadd.f32 0.0, %v233
  %v235 = vpop.f32.mrb[0].mxu0
  %236 = vdwg.mxu0
  %v238 = vsel %vm62, %v18, 0
  %v241 = vsel %vm62, %v19, 0
  %v244 = vsel %vm62, %v34, 0
  %v247 = vsel %vm62, %v35, 0
  %249 = vmatprep.subr.mxu0 0.0
  %250 = vmatpush1.xpose.msra.mxu0 %v244
  %251 = vmatprep.subr.mxu0 0.0
  %252 = vmatpush1.xpose.msra.mxu0 %v247
  %253 = vmatprep.subr.mxu0 0.0
  %254 = vmatpush1.xpose.msra.mxu0 0.0
  %255 = vmatprep.subr.mxu0 0.0
  %256 = vmatpush1.xpose.msra.mxu0 0.0
  %257 = vmatprep.subr.mxu0 0.0
  %258 = vmatpush1.xpose.msra.mxu0 0.0
  %259 = vmatprep.subr.mxu0 0.0
  %260 = vmatpush1.xpose.msra.mxu0 0.0
  %261 = vmatprep.subr.mxu0 0.0
  %262 = vmatpush1.xpose.msra.mxu0 0.0
  %263 = vmatprep.subr.mxu0 0.0
  %264 = vmatpush1.xpose.msra.mxu0 0.0
  %265 = vmatprep.subr.mxu0 0.0
  %266 = vmatpush1.xpose.msra.mxu0 0.0
  %267 = vmatprep.subr.mxu0 0.0
  %268 = vmatpush1.xpose.msra.mxu0 0.0
  %269 = vmatprep.subr.mxu0 0.0
  %270 = vmatpush1.xpose.msra.mxu0 0.0
  %271 = vmatprep.subr.mxu0 0.0
  %272 = vmatpush1.xpose.msra.mxu0 0.0
  %273 = vmatprep.subr.mxu0 0.0
  %274 = vmatpush1.xpose.msra.mxu0 0.0
  %275 = vmatprep.subr.mxu0 0.0
  %276 = vmatpush1.xpose.msra.mxu0 0.0
  %277 = vmatprep.subr.mxu0 0.0
  %278 = vmatpush1.xpose.msra.mxu0 0.0
  %279 = vmatprep.subr.mxu0 0.0
  %280 = vmatpush1.xpose.msra.mxu0 0.0
  %281 = vmatprep.subr.mxu0 0.0
  %282 = vmatpush1.xpose.msra.mxu0 0.0
  %283 = vmatprep.subr.mxu0 0.0
  %284 = vmatpush1.xpose.msra.mxu0 0.0
  %285 = vmatprep.subr.mxu0 0.0
  %286 = vmatpush1.xpose.msra.mxu0 0.0
  %287 = vmatprep.subr.mxu0 0.0
  %288 = vmatpush1.xpose.msra.mxu0 0.0
  %289 = vmatprep.subr.mxu0 0.0
  %290 = vmatpush1.xpose.msra.mxu0 0.0
  %291 = vmatprep.subr.mxu0 0.0
  %292 = vmatpush1.xpose.msra.mxu0 0.0
  %293 = vmatprep.subr.mxu0 0.0
  %294 = vmatpush1.xpose.msra.mxu0 0.0
  %295 = vmatprep.subr.mxu0 0.0
  %296 = vmatpush1.xpose.msra.mxu0 0.0
  %297 = vmatprep.subr.mxu0 0.0
  %298 = vmatpush1.xpose.msra.mxu0 0.0
  %299 = vmatprep.subr.mxu0 0.0
  %300 = vmatpush1.xpose.msra.mxu0 0.0
  %301 = vmatprep.subr.mxu0 0.0
  %302 = vmatpush1.xpose.msra.mxu0 0.0
  %303 = vmatprep.subr.mxu0 0.0
  %304 = vmatpush1.xpose.msra.mxu0 0.0
  %305 = vmatprep.subr.mxu0 0.0
  %306 = vmatpush1.xpose.msra.mxu0 0.0
  %307 = vmatprep.subr.mxu0 0.0
  %308 = vmatpush1.xpose.msra.mxu0 0.0
  %309 = vmatprep.subr.mxu0 0.0
  %310 = vmatpush1.xpose.msra.mxu0 0.0
  %311 = vmatprep.subr.mxu0 0.0
  %312 = vmatpush1.xpose.msra.mxu0 0.0
  %313 = vmatprep.mubr.f32.mxu0 0.0
  %314 = vmatmul.mubr.f32.gmra.mrb[0].mxu0 %v238
  %v315 = vpop.f32.mrb[0].mxu0
  %v316 = vadd.f32 0.0, %v315
  %v317 = vpop.f32.mrb[0].mxu0
  %318 = vmatprep.mubr.f32.mxu0 0.0
  %319 = vmatmul.mubr.f32.gmra.mrb[0].mxu0 %v241
  %v320 = vpop.f32.mrb[0].mxu0
  %v321 = vadd.f32 0.0, %v320
  %v322 = vpop.f32.mrb[0].mxu0
  %323 = vdwg.mxu0
  %v325 = vsel %vm62, %v20, 0
  %v328 = vsel %vm62, %v21, 0
  %v331 = vsel %vm62, %v36, 0
  %v334 = vsel %vm62, %v37, 0
  %336 = vmatprep.subr.mxu0 0.0
  %337 = vmatpush1.xpose.msra.mxu0 %v331
  %338 = vmatprep.subr.mxu0 0.0
  %339 = vmatpush1.xpose.msra.mxu0 %v334
  %340 = vmatprep.subr.mxu0 0.0
  %341 = vmatpush1.xpose.msra.mxu0 0.0
  %342 = vmatprep.subr.mxu0 0.0
  %343 = vmatpush1.xpose.msra.mxu0 0.0
  %344 = vmatprep.subr.mxu0 0.0
  %345 = vmatpush1.xpose.msra.mxu0 0.0
  %346 = vmatprep.subr.mxu0 0.0
  %347 = vmatpush1.xpose.msra.mxu0 0.0
  %348 = vmatprep.subr.mxu0 0.0
  %349 = vmatpush1.xpose.msra.mxu0 0.0
  %350 = vmatprep.subr.mxu0 0.0
  %351 = vmatpush1.xpose.msra.mxu0 0.0
  %352 = vmatprep.subr.mxu0 0.0
  %353 = vmatpush1.xpose.msra.mxu0 0.0
  %354 = vmatprep.subr.mxu0 0.0
  %355 = vmatpush1.xpose.msra.mxu0 0.0
  %356 = vmatprep.subr.mxu0 0.0
  %357 = vmatpush1.xpose.msra.mxu0 0.0
  %358 = vmatprep.subr.mxu0 0.0
  %359 = vmatpush1.xpose.msra.mxu0 0.0
  %360 = vmatprep.subr.mxu0 0.0
  %361 = vmatpush1.xpose.msra.mxu0 0.0
  %362 = vmatprep.subr.mxu0 0.0
  %363 = vmatpush1.xpose.msra.mxu0 0.0
  %364 = vmatprep.subr.mxu0 0.0
  %365 = vmatpush1.xpose.msra.mxu0 0.0
  %366 = vmatprep.subr.mxu0 0.0
  %367 = vmatpush1.xpose.msra.mxu0 0.0
  %368 = vmatprep.subr.mxu0 0.0
  %369 = vmatpush1.xpose.msra.mxu0 0.0
  %370 = vmatprep.subr.mxu0 0.0
  %371 = vmatpush1.xpose.msra.mxu0 0.0
  %372 = vmatprep.subr.mxu0 0.0
  %373 = vmatpush1.xpose.msra.mxu0 0.0
  %374 = vmatprep.subr.mxu0 0.0
  %375 = vmatpush1.xpose.msra.mxu0 0.0
  %376 = vmatprep.subr.mxu0 0.0
  %377 = vmatpush1.xpose.msra.mxu0 0.0
  %378 = vmatprep.subr.mxu0 0.0
  %379 = vmatpush1.xpose.msra.mxu0 0.0
  %380 = vmatprep.subr.mxu0 0.0
  %381 = vmatpush1.xpose.msra.mxu0 0.0
  %382 = vmatprep.subr.mxu0 0.0
  %383 = vmatpush1.xpose.msra.mxu0 0.0
  %384 = vmatprep.subr.mxu0 0.0
  %385 = vmatpush1.xpose.msra.mxu0 0.0
  %386 = vmatprep.subr.mxu0 0.0
  %387 = vmatpush1.xpose.msra.mxu0 0.0
  %388 = vmatprep.subr.mxu0 0.0
  %389 = vmatpush1.xpose.msra.mxu0 0.0
  %390 = vmatprep.subr.mxu0 0.0
  %391 = vmatpush1.xpose.msra.mxu0 0.0
  %392 = vmatprep.subr.mxu0 0.0
  %393 = vmatpush1.xpose.msra.mxu0 0.0
  %394 = vmatprep.subr.mxu0 0.0
  %395 = vmatpush1.xpose.msra.mxu0 0.0
  %396 = vmatprep.subr.mxu0 0.0
  %397 = vmatpush1.xpose.msra.mxu0 0.0
  %398 = vmatprep.subr.mxu0 0.0
  %399 = vmatpush1.xpose.msra.mxu0 0.0
  %400 = vmatprep.mubr.f32.mxu0 0.0
  %401 = vmatmul.mubr.f32.gmra.mrb[0].mxu0 %v325
  %v402 = vpop.f32.mrb[0].mxu0
  %v403 = vadd.f32 0.0, %v402
  %v404 = vpop.f32.mrb[0].mxu0
  %405 = vmatprep.mubr.f32.mxu0 0.0
  %406 = vmatmul.mubr.f32.gmra.mrb[0].mxu0 %v328
  %v407 = vpop.f32.mrb[0].mxu0
  %v408 = vadd.f32 0.0, %v407
  %v409 = vpop.f32.mrb[0].mxu0
  %410 = vdwg.mxu0
  %v412 = vsel %vm62, %v22, 0
  %v415 = vsel %vm62, %v23, 0
  %v418 = vsel %vm62, %v38, 0
  %v421 = vsel %vm62, %v39, 0
  %423 = vmatprep.subr.mxu0 0.0
  %424 = vmatpush1.xpose.msra.mxu0 %v418
  %425 = vmatprep.subr.mxu0 0.0
  %426 = vmatpush1.xpose.msra.mxu0 %v421
  %427 = vmatprep.subr.mxu0 0.0
  %428 = vmatpush1.xpose.msra.mxu0 0.0
  %429 = vmatprep.subr.mxu0 0.0
  %430 = vmatpush1.xpose.msra.mxu0 0.0
  %431 = vmatprep.subr.mxu0 0.0
  %432 = vmatpush1.xpose.msra.mxu0 0.0
  %433 = vmatprep.subr.mxu0 0.0
  %434 = vmatpush1.xpose.msra.mxu0 0.0
  %435 = vmatprep.subr.mxu0 0.0
  %436 = vmatpush1.xpose.msra.mxu0 0.0
  %437 = vmatprep.subr.mxu0 0.0
  %438 = vmatpush1.xpose.msra.mxu0 0.0
  %439 = vmatprep.subr.mxu0 0.0
  %440 = vmatpush1.xpose.msra.mxu0 0.0
  %441 = vmatprep.subr.mxu0 0.0
  %442 = vmatpush1.xpose.msra.mxu0 0.0
  %443 = vmatprep.subr.mxu0 0.0
  %444 = vmatpush1.xpose.msra.mxu0 0.0
  %445 = vmatprep.subr.mxu0 0.0
  %446 = vmatpush1.xpose.msra.mxu0 0.0
  %447 = vmatprep.subr.mxu0 0.0
  %448 = vmatpush1.xpose.msra.mxu0 0.0
  %449 = vmatprep.subr.mxu0 0.0
  %450 = vmatpush1.xpose.msra.mxu0 0.0
  %451 = vmatprep.subr.mxu0 0.0
  %452 = vmatpush1.xpose.msra.mxu0 0.0
  %453 = vmatprep.subr.mxu0 0.0
  %454 = vmatpush1.xpose.msra.mxu0 0.0
  %455 = vmatprep.subr.mxu0 0.0
  %456 = vmatpush1.xpose.msra.mxu0 0.0
  %457 = vmatprep.subr.mxu0 0.0
  %458 = vmatpush1.xpose.msra.mxu0 0.0
  %459 = vmatprep.subr.mxu0 0.0
  %460 = vmatpush1.xpose.msra.mxu0 0.0
  %461 = vmatprep.subr.mxu0 0.0
  %462 = vmatpush1.xpose.msra.mxu0 0.0
  %463 = vmatprep.subr.mxu0 0.0
  %464 = vmatpush1.xpose.msra.mxu0 0.0
  %465 = vmatprep.subr.mxu0 0.0
  %466 = vmatpush1.xpose.msra.mxu0 0.0
  %467 = vmatprep.subr.mxu0 0.0
  %468 = vmatpush1.xpose.msra.mxu0 0.0
  %469 = vmatprep.subr.mxu0 0.0
  %470 = vmatpush1.xpose.msra.mxu0 0.0
  %471 = vmatprep.subr.mxu0 0.0
  %472 = vmatpush1.xpose.msra.mxu0 0.0
  %473 = vmatprep.subr.mxu0 0.0
  %474 = vmatpush1.xpose.msra.mxu0 0.0
  %475 = vmatprep.subr.mxu0 0.0
  %476 = vmatpush1.xpose.msra.mxu0 0.0
  %477 = vmatprep.subr.mxu0 0.0
  %478 = vmatpush1.xpose.msra.mxu0 0.0
  %479 = vmatprep.subr.mxu0 0.0
  %480 = vmatpush1.xpose.msra.mxu0 0.0
  %481 = vmatprep.subr.mxu0 0.0
  %482 = vmatpush1.xpose.msra.mxu0 0.0
  %483 = vmatprep.subr.mxu0 0.0
  %484 = vmatpush1.xpose.msra.mxu0 0.0
  %485 = vmatprep.subr.mxu0 0.0
  %486 = vmatpush1.xpose.msra.mxu0 0.0
  %487 = vmatprep.mubr.f32.mxu0 0.0
  %488 = vmatmul.mubr.f32.gmra.mrb[0].mxu0 %v412
  %v489 = vpop.f32.mrb[0].mxu0
  %v490 = vadd.f32 0.0, %v489
  %v491 = vpop.f32.mrb[0].mxu0
  %492 = vmatprep.mubr.f32.mxu0 0.0
  %493 = vmatmul.mubr.f32.gmra.mrb[0].mxu0 %v415
  %v494 = vpop.f32.mrb[0].mxu0
  %v495 = vadd.f32 0.0, %v494
  %v496 = vpop.f32.mrb[0].mxu0
  %497 = vdwg.mxu0
  %v499 = vsel %vm62, %v24, 0
  %v502 = vsel %vm62, %v25, 0
  %v505 = vsel %vm62, %v40, 0
  %v508 = vsel %vm62, %v41, 0
  %510 = vmatprep.subr.mxu0 0.0
  %511 = vmatpush1.xpose.msra.mxu0 %v505
  %512 = vmatprep.subr.mxu0 0.0
  %513 = vmatpush1.xpose.msra.mxu0 %v508
  %514 = vmatprep.subr.mxu0 0.0
  %515 = vmatpush1.xpose.msra.mxu0 0.0
  %516 = vmatprep.subr.mxu0 0.0
  %517 = vmatpush1.xpose.msra.mxu0 0.0
  %518 = vmatprep.subr.mxu0 0.0
  %519 = vmatpush1.xpose.msra.mxu0 0.0
  %520 = vmatprep.subr.mxu0 0.0
  %521 = vmatpush1.xpose.msra.mxu0 0.0
  %522 = vmatprep.subr.mxu0 0.0
  %523 = vmatpush1.xpose.msra.mxu0 0.0
  %524 = vmatprep.subr.mxu0 0.0
  %525 = vmatpush1.xpose.msra.mxu0 0.0
  %526 = vmatprep.subr.mxu0 0.0
  %527 = vmatpush1.xpose.msra.mxu0 0.0
  %528 = vmatprep.subr.mxu0 0.0
  %529 = vmatpush1.xpose.msra.mxu0 0.0
  %530 = vmatprep.subr.mxu0 0.0
  %531 = vmatpush1.xpose.msra.mxu0 0.0
  %532 = vmatprep.subr.mxu0 0.0
  %533 = vmatpush1.xpose.msra.mxu0 0.0
  %534 = vmatprep.subr.mxu0 0.0
  %535 = vmatpush1.xpose.msra.mxu0 0.0
  %536 = vmatprep.subr.mxu0 0.0
  %537 = vmatpush1.xpose.msra.mxu0 0.0
  %538 = vmatprep.subr.mxu0 0.0
  %539 = vmatpush1.xpose.msra.mxu0 0.0
  %540 = vmatprep.subr.mxu0 0.0
  %541 = vmatpush1.xpose.msra.mxu0 0.0
  %542 = vmatprep.subr.mxu0 0.0
  %543 = vmatpush1.xpose.msra.mxu0 0.0
  %544 = vmatprep.subr.mxu0 0.0
  %545 = vmatpush1.xpose.msra.mxu0 0.0
  %546 = vmatprep.subr.mxu0 0.0
  %547 = vmatpush1.xpose.msra.mxu0 0.0
  %548 = vmatprep.subr.mxu0 0.0
  %549 = vmatpush1.xpose.msra.mxu0 0.0
  %550 = vmatprep.subr.mxu0 0.0
  %551 = vmatpush1.xpose.msra.mxu0 0.0
  %552 = vmatprep.subr.mxu0 0.0
  %553 = vmatpush1.xpose.msra.mxu0 0.0
  %554 = vmatprep.subr.mxu0 0.0
  %555 = vmatpush1.xpose.msra.mxu0 0.0
  %556 = vmatprep.subr.mxu0 0.0
  %557 = vmatpush1.xpose.msra.mxu0 0.0
  %558 = vmatprep.subr.mxu0 0.0
  %559 = vmatpush1.xpose.msra.mxu0 0.0
  %560 = vmatprep.subr.mxu0 0.0
  %561 = vmatpush1.xpose.msra.mxu0 0.0
  %562 = vmatprep.subr.mxu0 0.0
  %563 = vmatpush1.xpose.msra.mxu0 0.0
  %564 = vmatprep.subr.mxu0 0.0
  %565 = vmatpush1.xpose.msra.mxu0 0.0
  %566 = vmatprep.subr.mxu0 0.0
  %567 = vmatpush1.xpose.msra.mxu0 0.0
  %568 = vmatprep.subr.mxu0 0.0
  %569 = vmatpush1.xpose.msra.mxu0 0.0
  %570 = vmatprep.subr.mxu0 0.0
  %571 = vmatpush1.xpose.msra.mxu0 0.0
  %572 = vmatprep.subr.mxu0 0.0
  %573 = vmatpush1.xpose.msra.mxu0 0.0
  %574 = vmatprep.mubr.f32.mxu0 0.0
  %575 = vmatmul.mubr.f32.gmra.mrb[0].mxu0 %v499
  %v576 = vpop.f32.mrb[0].mxu0
  %v577 = vadd.f32 0.0, %v576
  %v578 = vpop.f32.mrb[0].mxu0
  %579 = vmatprep.mubr.f32.mxu0 0.0
  %580 = vmatmul.mubr.f32.gmra.mrb[0].mxu0 %v502
  %v581 = vpop.f32.mrb[0].mxu0
  %v582 = vadd.f32 0.0, %v581
  %v583 = vpop.f32.mrb[0].mxu0
  %584 = vdwg.mxu0
  %v586 = vsel %vm62, %v26, 0
  %v589 = vsel %vm62, %v27, 0
  %v592 = vsel %vm62, %v42, 0
  %v595 = vsel %vm62, %v43, 0
  %597 = vmatprep.subr.mxu0 0.0
  %598 = vmatpush1.xpose.msra.mxu0 %v592
  %599 = vmatprep.subr.mxu0 0.0
  %600 = vmatpush1.xpose.msra.mxu0 %v595
  %601 = vmatprep.subr.mxu0 0.0
  %602 = vmatpush1.xpose.msra.mxu0 0.0
  %603 = vmatprep.subr.mxu0 0.0
  %604 = vmatpush1.xpose.msra.mxu0 0.0
  %605 = vmatprep.subr.mxu0 0.0
  %606 = vmatpush1.xpose.msra.mxu0 0.0
  %607 = vmatprep.subr.mxu0 0.0
  %608 = vmatpush1.xpose.msra.mxu0 0.0
  %609 = vmatprep.subr.mxu0 0.0
  %610 = vmatpush1.xpose.msra.mxu0 0.0
  %611 = vmatprep.subr.mxu0 0.0
  %612 = vmatpush1.xpose.msra.mxu0 0.0
  %613 = vmatprep.subr.mxu0 0.0
  %614 = vmatpush1.xpose.msra.mxu0 0.0
  %615 = vmatprep.subr.mxu0 0.0
  %616 = vmatpush1.xpose.msra.mxu0 0.0
  %617 = vmatprep.subr.mxu0 0.0
  %618 = vmatpush1.xpose.msra.mxu0 0.0
  %619 = vmatprep.subr.mxu0 0.0
  %620 = vmatpush1.xpose.msra.mxu0 0.0
  %621 = vmatprep.subr.mxu0 0.0
  %622 = vmatpush1.xpose.msra.mxu0 0.0
  %623 = vmatprep.subr.mxu0 0.0
  %624 = vmatpush1.xpose.msra.mxu0 0.0
  %625 = vmatprep.subr.mxu0 0.0
  %626 = vmatpush1.xpose.msra.mxu0 0.0
  %627 = vmatprep.subr.mxu0 0.0
  %628 = vmatpush1.xpose.msra.mxu0 0.0
  %629 = vmatprep.subr.mxu0 0.0
  %630 = vmatpush1.xpose.msra.mxu0 0.0
  %631 = vmatprep.subr.mxu0 0.0
  %632 = vmatpush1.xpose.msra.mxu0 0.0
  %633 = vmatprep.subr.mxu0 0.0
  %634 = vmatpush1.xpose.msra.mxu0 0.0
  %635 = vmatprep.subr.mxu0 0.0
  %636 = vmatpush1.xpose.msra.mxu0 0.0
  %637 = vmatprep.subr.mxu0 0.0
  %638 = vmatpush1.xpose.msra.mxu0 0.0
  %639 = vmatprep.subr.mxu0 0.0
  %640 = vmatpush1.xpose.msra.mxu0 0.0
  %641 = vmatprep.subr.mxu0 0.0
  %642 = vmatpush1.xpose.msra.mxu0 0.0
  %643 = vmatprep.subr.mxu0 0.0
  %644 = vmatpush1.xpose.msra.mxu0 0.0
  %645 = vmatprep.subr.mxu0 0.0
  %646 = vmatpush1.xpose.msra.mxu0 0.0
  %647 = vmatprep.subr.mxu0 0.0
  %648 = vmatpush1.xpose.msra.mxu0 0.0
  %649 = vmatprep.subr.mxu0 0.0
  %650 = vmatpush1.xpose.msra.mxu0 0.0
  %651 = vmatprep.subr.mxu0 0.0
  %652 = vmatpush1.xpose.msra.mxu0 0.0
  %653 = vmatprep.subr.mxu0 0.0
  %654 = vmatpush1.xpose.msra.mxu0 0.0
  %655 = vmatprep.subr.mxu0 0.0
  %656 = vmatpush1.xpose.msra.mxu0 0.0
  %657 = vmatprep.subr.mxu0 0.0
  %658 = vmatpush1.xpose.msra.mxu0 0.0
  %659 = vmatprep.subr.mxu0 0.0
  %660 = vmatpush1.xpose.msra.mxu0 0.0
  %661 = vmatprep.mubr.f32.mxu0 0.0
  %662 = vmatmul.mubr.f32.gmra.mrb[0].mxu0 %v586
  %v663 = vpop.f32.mrb[0].mxu0
  %v664 = vadd.f32 0.0, %v663
  %v665 = vpop.f32.mrb[0].mxu0
  %666 = vmatprep.mubr.f32.mxu0 0.0
  %667 = vmatmul.mubr.f32.gmra.mrb[0].mxu0 %v589
  %v668 = vpop.f32.mrb[0].mxu0
  %v669 = vadd.f32 0.0, %v668
  %v670 = vpop.f32.mrb[0].mxu0
  %671 = vdwg.mxu0
  %v673 = vsel %vm62, %v28, 0
  %v676 = vsel %vm62, %v29, 0
  %v679 = vsel %vm62, %v44, 0
  %v682 = vsel %vm62, %v45, 0
  %684 = vmatprep.subr.mxu0 0.0
  %685 = vmatpush1.xpose.msra.mxu0 %v679
  %686 = vmatprep.subr.mxu0 0.0
  %687 = vmatpush1.xpose.msra.mxu0 %v682
  %688 = vmatprep.subr.mxu0 0.0
  %689 = vmatpush1.xpose.msra.mxu0 0.0
  %690 = vmatprep.subr.mxu0 0.0
  %691 = vmatpush1.xpose.msra.mxu0 0.0
  %692 = vmatprep.subr.mxu0 0.0
  %693 = vmatpush1.xpose.msra.mxu0 0.0
  %694 = vmatprep.subr.mxu0 0.0
  %695 = vmatpush1.xpose.msra.mxu0 0.0
  %696 = vmatprep.subr.mxu0 0.0
  %697 = vmatpush1.xpose.msra.mxu0 0.0
  %698 = vmatprep.subr.mxu0 0.0
  %699 = vmatpush1.xpose.msra.mxu0 0.0
  %700 = vmatprep.subr.mxu0 0.0
  %701 = vmatpush1.xpose.msra.mxu0 0.0
  %702 = vmatprep.subr.mxu0 0.0
  %703 = vmatpush1.xpose.msra.mxu0 0.0
  %704 = vmatprep.subr.mxu0 0.0
  %705 = vmatpush1.xpose.msra.mxu0 0.0
  %706 = vmatprep.subr.mxu0 0.0
  %707 = vmatpush1.xpose.msra.mxu0 0.0
  %708 = vmatprep.subr.mxu0 0.0
  %709 = vmatpush1.xpose.msra.mxu0 0.0
  %710 = vmatprep.subr.mxu0 0.0
  %711 = vmatpush1.xpose.msra.mxu0 0.0
  %712 = vmatprep.subr.mxu0 0.0
  %713 = vmatpush1.xpose.msra.mxu0 0.0
  %714 = vmatprep.subr.mxu0 0.0
  %715 = vmatpush1.xpose.msra.mxu0 0.0
  %716 = vmatprep.subr.mxu0 0.0
  %717 = vmatpush1.xpose.msra.mxu0 0.0
  %718 = vmatprep.subr.mxu0 0.0
  %719 = vmatpush1.xpose.msra.mxu0 0.0
  %720 = vmatprep.subr.mxu0 0.0
  %721 = vmatpush1.xpose.msra.mxu0 0.0
  %722 = vmatprep.subr.mxu0 0.0
  %723 = vmatpush1.xpose.msra.mxu0 0.0
  %724 = vmatprep.subr.mxu0 0.0
  %725 = vmatpush1.xpose.msra.mxu0 0.0
  %726 = vmatprep.subr.mxu0 0.0
  %727 = vmatpush1.xpose.msra.mxu0 0.0
  %728 = vmatprep.subr.mxu0 0.0
  %729 = vmatpush1.xpose.msra.mxu0 0.0
  %730 = vmatprep.subr.mxu0 0.0
  %731 = vmatpush1.xpose.msra.mxu0 0.0
  %732 = vmatprep.subr.mxu0 0.0
  %733 = vmatpush1.xpose.msra.mxu0 0.0
  %734 = vmatprep.subr.mxu0 0.0
  %735 = vmatpush1.xpose.msra.mxu0 0.0
  %736 = vmatprep.subr.mxu0 0.0
  %737 = vmatpush1.xpose.msra.mxu0 0.0
  %738 = vmatprep.subr.mxu0 0.0
  %739 = vmatpush1.xpose.msra.mxu0 0.0
  %740 = vmatprep.subr.mxu0 0.0
  %741 = vmatpush1.xpose.msra.mxu0 0.0
  %742 = vmatprep.subr.mxu0 0.0
  %743 = vmatpush1.xpose.msra.mxu0 0.0
  %744 = vmatprep.subr.mxu0 0.0
  %745 = vmatpush1.xpose.msra.mxu0 0.0
  %746 = vmatprep.subr.mxu0 0.0
  %747 = vmatpush1.xpose.msra.mxu0 0.0
  %748 = vmatprep.mubr.f32.mxu0 0.0
  %749 = vmatmul.mubr.f32.gmra.mrb[0].mxu0 %v673
  %v750 = vpop.f32.mrb[0].mxu0
  %v751 = vadd.f32 0.0, %v750
  %v752 = vpop.f32.mrb[0].mxu0
  %753 = vmatprep.mubr.f32.mxu0 0.0
  %754 = vmatmul.mubr.f32.gmra.mrb[0].mxu0 %v676
  %v755 = vpop.f32.mrb[0].mxu0
  %v756 = vadd.f32 0.0, %v755
  %v757 = vpop.f32.mrb[0].mxu0
  %758 = vdwg.mxu0
  %v759 = vmul.f32 %v142, 0.17677669
  %v760 = vmul.f32 %v147, 0.17677669
  %v761 = vmul.f32 %v229, 0.17677669
  %v762 = vmul.f32 %v234, 0.17677669
  %v763 = vmul.f32 %v316, 0.17677669
  %v764 = vmul.f32 %v321, 0.17677669
  %v765 = vmul.f32 %v403, 0.17677669
  %v766 = vmul.f32 %v408, 0.17677669
  %v767 = vmul.f32 %v490, 0.17677669
  %v768 = vmul.f32 %v495, 0.17677669
  %v769 = vmul.f32 %v577, 0.17677669
  %v770 = vmul.f32 %v582, 0.17677669
  %v771 = vmul.f32 %v664, 0.17677669
  %v772 = vmul.f32 %v669, 0.17677669
  %v773 = vmul.f32 %v751, 0.17677669
  %v774 = vmul.f32 %v756, 0.17677669
  %vm775 = vcmask 130048
  %v776 = vsel %vm775, %v759, -inf
  %777 = vmax.xlane.f32.xlu0 %v776
  %v778 = vpop.xlane.xlu0 %777
  %v779 = vsel %vm775, %v760, -inf
  %780 = vmax.xlane.f32.xlu0 %v779
  %v781 = vpop.xlane.xlu0 %780
  %v782 = vsel %vm775, %v761, -inf
  %783 = vmax.xlane.f32.xlu0 %v782
  %v784 = vpop.xlane.xlu0 %783
  %v785 = vsel %vm775, %v762, -inf
  %786 = vmax.xlane.f32.xlu0 %v785
  %v787 = vpop.xlane.xlu0 %786
  %v788 = vsel %vm775, %v763, -inf
  %789 = vmax.xlane.f32.xlu0 %v788
  %v790 = vpop.xlane.xlu0 %789
  %v791 = vsel %vm775, %v764, -inf
  %792 = vmax.xlane.f32.xlu0 %v791
  %v793 = vpop.xlane.xlu0 %792
  %v794 = vsel %vm775, %v765, -inf
  %795 = vmax.xlane.f32.xlu0 %v794
  %v796 = vpop.xlane.xlu0 %795
  %v797 = vsel %vm775, %v766, -inf
  %798 = vmax.xlane.f32.xlu0 %v797
  %v799 = vpop.xlane.xlu0 %798
  %v800 = vsel %vm775, %v767, -inf
  %801 = vmax.xlane.f32.xlu0 %v800
  %v802 = vpop.xlane.xlu0 %801
  %v803 = vsel %vm775, %v768, -inf
  %804 = vmax.xlane.f32.xlu0 %v803
  %v805 = vpop.xlane.xlu0 %804
  %v806 = vsel %vm775, %v769, -inf
  %807 = vmax.xlane.f32.xlu0 %v806
  %v808 = vpop.xlane.xlu0 %807
  %v809 = vsel %vm775, %v770, -inf
  %810 = vmax.xlane.f32.xlu0 %v809
  %v811 = vpop.xlane.xlu0 %810
  %v812 = vsel %vm775, %v771, -inf
  %813 = vmax.xlane.f32.xlu0 %v812
  %v814 = vpop.xlane.xlu0 %813
  %v815 = vsel %vm775, %v772, -inf
  %816 = vmax.xlane.f32.xlu0 %v815
  %v817 = vpop.xlane.xlu0 %816
  %v818 = vsel %vm775, %v773, -inf
  %819 = vmax.xlane.f32.xlu0 %v818
  %v820 = vpop.xlane.xlu0 %819
  %v821 = vsel %vm775, %v774, -inf
  %822 = vmax.xlane.f32.xlu0 %v821
  %v823 = vpop.xlane.xlu0 %822
  %v824 = vsub.f32 %v759, %v778
  %v825 = vsub.f32 %v760, %v781
  %v826 = vsub.f32 %v761, %v784
  %v827 = vsub.f32 %v762, %v787
  %v828 = vsub.f32 %v763, %v790
  %v829 = vsub.f32 %v764, %v793
  %v830 = vsub.f32 %v765, %v796
  %v831 = vsub.f32 %v766, %v799
  %v832 = vsub.f32 %v767, %v802
  %v833 = vsub.f32 %v768, %v805
  %v834 = vsub.f32 %v769, %v808
  %v835 = vsub.f32 %v770, %v811
  %v836 = vsub.f32 %v771, %v814
  %v837 = vsub.f32 %v772, %v817
  %v838 = vsub.f32 %v773, %v820
  %v839 = vsub.f32 %v774, %v823
  %v840 = vmul.f32 %v824, 1.442695
  %v841 = vpow.pop %v840
  %v842 = vmul.f32 %v825, 1.442695
  %v843 = vpow.pop %v842
  %v844 = vmul.f32 %v826, 1.442695
  %v845 = vpow.pop %v844
  %v846 = vmul.f32 %v827, 1.442695
  %v847 = vpow.pop %v846
  %v848 = vmul.f32 %v828, 1.442695
  %v849 = vpow.pop %v848
  %v850 = vmul.f32 %v829, 1.442695
  %v851 = vpow.pop %v850
  %v852 = vmul.f32 %v830, 1.442695
  %v853 = vpow.pop %v852
  %v854 = vmul.f32 %v831, 1.442695
  %v855 = vpow.pop %v854
  %v856 = vmul.f32 %v832, 1.442695
  %v857 = vpow.pop %v856
  %v858 = vmul.f32 %v833, 1.442695
  %v859 = vpow.pop %v858
  %v860 = vmul.f32 %v834, 1.442695
  %v861 = vpow.pop %v860
  %v862 = vmul.f32 %v835, 1.442695
  %v863 = vpow.pop %v862
  %v864 = vmul.f32 %v836, 1.442695
  %v865 = vpow.pop %v864
  %v866 = vmul.f32 %v837, 1.442695
  %v867 = vpow.pop %v866
  %v868 = vmul.f32 %v838, 1.442695
  %v869 = vpow.pop %v868
  %v870 = vmul.f32 %v839, 1.442695
  %v871 = vpow.pop %v870
  %v872 = vsel %vm775, %v841, 0.0
  %873 = vadd.xlane.f32.xlu0 %v872
  %v874 = vpop.xlane.xlu0 %873
  %v875 = vsel %vm775, %v843, 0.0
  %876 = vadd.xlane.f32.xlu0 %v875
  %v877 = vpop.xlane.xlu0 %876
  %v878 = vsel %vm775, %v845, 0.0
  %879 = vadd.xlane.f32.xlu0 %v878
  %v880 = vpop.xlane.xlu0 %879
  %v881 = vsel %vm775, %v847, 0.0
  %882 = vadd.xlane.f32.xlu0 %v881
  %v883 = vpop.xlane.xlu0 %882
  %v884 = vsel %vm775, %v849, 0.0
  %885 = vadd.xlane.f32.xlu0 %v884
  %v886 = vpop.xlane.xlu0 %885
  %v887 = vsel %vm775, %v851, 0.0
  %888 = vadd.xlane.f32.xlu0 %v887
  %v889 = vpop.xlane.xlu0 %888
  %v890 = vsel %vm775, %v853, 0.0
  %891 = vadd.xlane.f32.xlu0 %v890
  %v892 = vpop.xlane.xlu0 %891
  %v893 = vsel %vm775, %v855, 0.0
  %894 = vadd.xlane.f32.xlu0 %v893
  %v895 = vpop.xlane.xlu0 %894
  %v896 = vsel %vm775, %v857, 0.0
  %897 = vadd.xlane.f32.xlu0 %v896
  %v898 = vpop.xlane.xlu0 %897
  %v899 = vsel %vm775, %v859, 0.0
  %900 = vadd.xlane.f32.xlu0 %v899
  %v901 = vpop.xlane.xlu0 %900
  %v902 = vsel %vm775, %v861, 0.0
  %903 = vadd.xlane.f32.xlu0 %v902
  %v904 = vpop.xlane.xlu0 %903
  %v905 = vsel %vm775, %v863, 0.0
  %906 = vadd.xlane.f32.xlu0 %v905
  %v907 = vpop.xlane.xlu0 %906
  %v908 = vsel %vm775, %v865, 0.0
  %909 = vadd.xlane.f32.xlu0 %v908
  %v910 = vpop.xlane.xlu0 %909
  %v911 = vsel %vm775, %v867, 0.0
  %912 = vadd.xlane.f32.xlu0 %v911
  %v913 = vpop.xlane.xlu0 %912
  %v914 = vsel %vm775, %v869, 0.0
  %915 = vadd.xlane.f32.xlu0 %v914
  %v916 = vpop.xlane.xlu0 %915
  %v917 = vsel %vm775, %v871, 0.0
  %918 = vadd.xlane.f32.xlu0 %v917
  %v919 = vpop.xlane.xlu0 %918
  %v920 = vrcp.pop %v874
  %v921 = vmul.f32 %v841, %v920
  %v922 = vrcp.pop %v877
  %v923 = vmul.f32 %v843, %v922
  %v924 = vrcp.pop %v880
  %v925 = vmul.f32 %v845, %v924
  %v926 = vrcp.pop %v883
  %v927 = vmul.f32 %v847, %v926
  %v928 = vrcp.pop %v886
  %v929 = vmul.f32 %v849, %v928
  %v930 = vrcp.pop %v889
  %v931 = vmul.f32 %v851, %v930
  %v932 = vrcp.pop %v892
  %v933 = vmul.f32 %v853, %v932
  %v934 = vrcp.pop %v895
  %v935 = vmul.f32 %v855, %v934
  %v936 = vrcp.pop %v898
  %v937 = vmul.f32 %v857, %v936
  %v938 = vrcp.pop %v901
  %v939 = vmul.f32 %v859, %v938
  %v940 = vrcp.pop %v904
  %v941 = vmul.f32 %v861, %v940
  %v942 = vrcp.pop %v907
  %v943 = vmul.f32 %v863, %v942
  %v944 = vrcp.pop %v910
  %v945 = vmul.f32 %v865, %v944
  %v946 = vrcp.pop %v913
  %v947 = vmul.f32 %v867, %v946
  %v948 = vrcp.pop %v916
  %v949 = vmul.f32 %v869, %v948
  %v950 = vrcp.pop %v919
  %v951 = vmul.f32 %v871, %v950
  %v953 = vsel %vm775, %v921, 0
  %v956 = vsel %vm775, %v923, 0
  %958 = vmatprep.subr.mxu0 0.0
  %959 = vmatpush1.msra.mxu0 %v46
  %960 = vmatprep.subr.mxu0 0.0
  %961 = vmatpush1.msra.mxu0 %v47
  %962 = vmatprep.subr.mxu0 0.0
  %963 = vmatpush1.msra.mxu0 0.0
  %964 = vmatprep.subr.mxu0 0.0
  %965 = vmatpush1.msra.mxu0 0.0
  %966 = vmatprep.subr.mxu0 0.0
  %967 = vmatpush1.msra.mxu0 0.0
  %968 = vmatprep.subr.mxu0 0.0
  %969 = vmatpush1.msra.mxu0 0.0
  %970 = vmatprep.subr.mxu0 0.0
  %971 = vmatpush1.msra.mxu0 0.0
  %972 = vmatprep.subr.mxu0 0.0
  %973 = vmatpush1.msra.mxu0 0.0
  %974 = vmatprep.subr.mxu0 0.0
  %975 = vmatpush1.msra.mxu0 0.0
  %976 = vmatprep.subr.mxu0 0.0
  %977 = vmatpush1.msra.mxu0 0.0
  %978 = vmatprep.subr.mxu0 0.0
  %979 = vmatpush1.msra.mxu0 0.0
  %980 = vmatprep.subr.mxu0 0.0
  %981 = vmatpush1.msra.mxu0 0.0
  %982 = vmatprep.subr.mxu0 0.0
  %983 = vmatpush1.msra.mxu0 0.0
  %984 = vmatprep.subr.mxu0 0.0
  %985 = vmatpush1.msra.mxu0 0.0
  %986 = vmatprep.subr.mxu0 0.0
  %987 = vmatpush1.msra.mxu0 0.0
  %988 = vmatprep.subr.mxu0 0.0
  %989 = vmatpush1.msra.mxu0 0.0
  %990 = vmatprep.subr.mxu0 0.0
  %991 = vmatpush1.msra.mxu0 0.0
  %992 = vmatprep.subr.mxu0 0.0
  %993 = vmatpush1.msra.mxu0 0.0
  %994 = vmatprep.subr.mxu0 0.0
  %995 = vmatpush1.msra.mxu0 0.0
  %996 = vmatprep.subr.mxu0 0.0
  %997 = vmatpush1.msra.mxu0 0.0
  %998 = vmatprep.subr.mxu0 0.0
  %999 = vmatpush1.msra.mxu0 0.0
  %1000 = vmatprep.subr.mxu0 0.0
  %1001 = vmatpush1.msra.mxu0 0.0
  %1002 = vmatprep.subr.mxu0 0.0
  %1003 = vmatpush1.msra.mxu0 0.0
  %1004 = vmatprep.subr.mxu0 0.0
  %1005 = vmatpush1.msra.mxu0 0.0
  %1006 = vmatprep.subr.mxu0 0.0
  %1007 = vmatpush1.msra.mxu0 0.0
  %1008 = vmatprep.subr.mxu0 0.0
  %1009 = vmatpush1.msra.mxu0 0.0
  %1010 = vmatprep.subr.mxu0 0.0
  %1011 = vmatpush1.msra.mxu0 0.0
  %1012 = vmatprep.subr.mxu0 0.0
  %1013 = vmatpush1.msra.mxu0 0.0
  %1014 = vmatprep.subr.mxu0 0.0
  %1015 = vmatpush1.msra.mxu0 0.0
  %1016 = vmatprep.subr.mxu0 0.0
  %1017 = vmatpush1.msra.mxu0 0.0
  %1018 = vmatprep.subr.mxu0 0.0
  %1019 = vmatpush1.msra.mxu0 0.0
  %1020 = vmatprep.subr.mxu0 0.0
  %1021 = vmatpush1.msra.mxu0 0.0
  %1022 = vmatprep.mubr.f32.mxu0 0.0
  %1023 = vmatmul.mubr.f32.gmra.mrb[0].mxu0 %v953
  %v1024 = vpop.f32.mrb[0].mxu0
  %v1025 = vadd.f32 0.0, %v1024
  %v1026 = vpop.f32.mrb[0].mxu0
  %1027 = vmatprep.mubr.f32.mxu0 0.0
  %1028 = vmatmul.mubr.f32.gmra.mrb[0].mxu0 %v956
  %v1029 = vpop.f32.mrb[0].mxu0
  %v1030 = vadd.f32 0.0, %v1029
  %v1031 = vpop.f32.mrb[0].mxu0
  %1032 = vdwg.mxu0
  %v1034 = vsel %vm775, %v925, 0
  %v1037 = vsel %vm775, %v927, 0
  %1039 = vmatprep.subr.mxu0 0.0
  %1040 = vmatpush1.msra.mxu0 %v48
  %1041 = vmatprep.subr.mxu0 0.0
  %1042 = vmatpush1.msra.mxu0 %v49
  %1043 = vmatprep.subr.mxu0 0.0
  %1044 = vmatpush1.msra.mxu0 0.0
  %1045 = vmatprep.subr.mxu0 0.0
  %1046 = vmatpush1.msra.mxu0 0.0
  %1047 = vmatprep.subr.mxu0 0.0
  %1048 = vmatpush1.msra.mxu0 0.0
  %1049 = vmatprep.subr.mxu0 0.0
  %1050 = vmatpush1.msra.mxu0 0.0
  %1051 = vmatprep.subr.mxu0 0.0
  %1052 = vmatpush1.msra.mxu0 0.0
  %1053 = vmatprep.subr.mxu0 0.0
  %1054 = vmatpush1.msra.mxu0 0.0
  %1055 = vmatprep.subr.mxu0 0.0
  %1056 = vmatpush1.msra.mxu0 0.0
  %1057 = vmatprep.subr.mxu0 0.0
  %1058 = vmatpush1.msra.mxu0 0.0
  %1059 = vmatprep.subr.mxu0 0.0
  %1060 = vmatpush1.msra.mxu0 0.0
  %1061 = vmatprep.subr.mxu0 0.0
  %1062 = vmatpush1.msra.mxu0 0.0
  %1063 = vmatprep.subr.mxu0 0.0
  %1064 = vmatpush1.msra.mxu0 0.0
  %1065 = vmatprep.subr.mxu0 0.0
  %1066 = vmatpush1.msra.mxu0 0.0
  %1067 = vmatprep.subr.mxu0 0.0
  %1068 = vmatpush1.msra.mxu0 0.0
  %1069 = vmatprep.subr.mxu0 0.0
  %1070 = vmatpush1.msra.mxu0 0.0
  %1071 = vmatprep.subr.mxu0 0.0
  %1072 = vmatpush1.msra.mxu0 0.0
  %1073 = vmatprep.subr.mxu0 0.0
  %1074 = vmatpush1.msra.mxu0 0.0
  %1075 = vmatprep.subr.mxu0 0.0
  %1076 = vmatpush1.msra.mxu0 0.0
  %1077 = vmatprep.subr.mxu0 0.0
  %1078 = vmatpush1.msra.mxu0 0.0
  %1079 = vmatprep.subr.mxu0 0.0
  %1080 = vmatpush1.msra.mxu0 0.0
  %1081 = vmatprep.subr.mxu0 0.0
  %1082 = vmatpush1.msra.mxu0 0.0
  %1083 = vmatprep.subr.mxu0 0.0
  %1084 = vmatpush1.msra.mxu0 0.0
  %1085 = vmatprep.subr.mxu0 0.0
  %1086 = vmatpush1.msra.mxu0 0.0
  %1087 = vmatprep.subr.mxu0 0.0
  %1088 = vmatpush1.msra.mxu0 0.0
  %1089 = vmatprep.subr.mxu0 0.0
  %1090 = vmatpush1.msra.mxu0 0.0
  %1091 = vmatprep.subr.mxu0 0.0
  %1092 = vmatpush1.msra.mxu0 0.0
  %1093 = vmatprep.subr.mxu0 0.0
  %1094 = vmatpush1.msra.mxu0 0.0
  %1095 = vmatprep.subr.mxu0 0.0
  %1096 = vmatpush1.msra.mxu0 0.0
  %1097 = vmatprep.subr.mxu0 0.0
  %1098 = vmatpush1.msra.mxu0 0.0
  %1099 = vmatprep.subr.mxu0 0.0
  %1100 = vmatpush1.msra.mxu0 0.0
  %1101 = vmatprep.subr.mxu0 0.0
  %1102 = vmatpush1.msra.mxu0 0.0
  %1103 = vmatprep.mubr.f32.mxu0 0.0
  %1104 = vmatmul.mubr.f32.gmra.mrb[0].mxu0 %v1034
  %v1105 = vpop.f32.mrb[0].mxu0
  %v1106 = vadd.f32 0.0, %v1105
  %v1107 = vpop.f32.mrb[0].mxu0
  %1108 = vmatprep.mubr.f32.mxu0 0.0
  %1109 = vmatmul.mubr.f32.gmra.mrb[0].mxu0 %v1037
  %v1110 = vpop.f32.mrb[0].mxu0
  %v1111 = vadd.f32 0.0, %v1110
  %v1112 = vpop.f32.mrb[0].mxu0
  %1113 = vdwg.mxu0
  %v1115 = vsel %vm775, %v929, 0
  %v1118 = vsel %vm775, %v931, 0
  %1120 = vmatprep.subr.mxu0 0.0
  %1121 = vmatpush1.msra.mxu0 %v50
  %1122 = vmatprep.subr.mxu0 0.0
  %1123 = vmatpush1.msra.mxu0 %v51
  %1124 = vmatprep.subr.mxu0 0.0
  %1125 = vmatpush1.msra.mxu0 0.0
  %1126 = vmatprep.subr.mxu0 0.0
  %1127 = vmatpush1.msra.mxu0 0.0
  %1128 = vmatprep.subr.mxu0 0.0
  %1129 = vmatpush1.msra.mxu0 0.0
  %1130 = vmatprep.subr.mxu0 0.0
  %1131 = vmatpush1.msra.mxu0 0.0
  %1132 = vmatprep.subr.mxu0 0.0
  %1133 = vmatpush1.msra.mxu0 0.0
  %1134 = vmatprep.subr.mxu0 0.0
  %1135 = vmatpush1.msra.mxu0 0.0
  %1136 = vmatprep.subr.mxu0 0.0
  %1137 = vmatpush1.msra.mxu0 0.0
  %1138 = vmatprep.subr.mxu0 0.0
  %1139 = vmatpush1.msra.mxu0 0.0
  %1140 = vmatprep.subr.mxu0 0.0
  %1141 = vmatpush1.msra.mxu0 0.0
  %1142 = vmatprep.subr.mxu0 0.0
  %1143 = vmatpush1.msra.mxu0 0.0
  %1144 = vmatprep.subr.mxu0 0.0
  %1145 = vmatpush1.msra.mxu0 0.0
  %1146 = vmatprep.subr.mxu0 0.0
  %1147 = vmatpush1.msra.mxu0 0.0
  %1148 = vmatprep.subr.mxu0 0.0
  %1149 = vmatpush1.msra.mxu0 0.0
  %1150 = vmatprep.subr.mxu0 0.0
  %1151 = vmatpush1.msra.mxu0 0.0
  %1152 = vmatprep.subr.mxu0 0.0
  %1153 = vmatpush1.msra.mxu0 0.0
  %1154 = vmatprep.subr.mxu0 0.0
  %1155 = vmatpush1.msra.mxu0 0.0
  %1156 = vmatprep.subr.mxu0 0.0
  %1157 = vmatpush1.msra.mxu0 0.0
  %1158 = vmatprep.subr.mxu0 0.0
  %1159 = vmatpush1.msra.mxu0 0.0
  %1160 = vmatprep.subr.mxu0 0.0
  %1161 = vmatpush1.msra.mxu0 0.0
  %1162 = vmatprep.subr.mxu0 0.0
  %1163 = vmatpush1.msra.mxu0 0.0
  %1164 = vmatprep.subr.mxu0 0.0
  %1165 = vmatpush1.msra.mxu0 0.0
  %1166 = vmatprep.subr.mxu0 0.0
  %1167 = vmatpush1.msra.mxu0 0.0
  %1168 = vmatprep.subr.mxu0 0.0
  %1169 = vmatpush1.msra.mxu0 0.0
  %1170 = vmatprep.subr.mxu0 0.0
  %1171 = vmatpush1.msra.mxu0 0.0
  %1172 = vmatprep.subr.mxu0 0.0
  %1173 = vmatpush1.msra.mxu0 0.0
  %1174 = vmatprep.subr.mxu0 0.0
  %1175 = vmatpush1.msra.mxu0 0.0
  %1176 = vmatprep.subr.mxu0 0.0
  %1177 = vmatpush1.msra.mxu0 0.0
  %1178 = vmatprep.subr.mxu0 0.0
  %1179 = vmatpush1.msra.mxu0 0.0
  %1180 = vmatprep.subr.mxu0 0.0
  %1181 = vmatpush1.msra.mxu0 0.0
  %1182 = vmatprep.subr.mxu0 0.0
  %1183 = vmatpush1.msra.mxu0 0.0
  %1184 = vmatprep.mubr.f32.mxu0 0.0
  %1185 = vmatmul.mubr.f32.gmra.mrb[0].mxu0 %v1115
  %v1186 = vpop.f32.mrb[0].mxu0
  %v1187 = vadd.f32 0.0, %v1186
  %v1188 = vpop.f32.mrb[0].mxu0
  %1189 = vmatprep.mubr.f32.mxu0 0.0
  %1190 = vmatmul.mubr.f32.gmra.mrb[0].mxu0 %v1118
  %v1191 = vpop.f32.mrb[0].mxu0
  %v1192 = vadd.f32 0.0, %v1191
  %v1193 = vpop.f32.mrb[0].mxu0
  %1194 = vdwg.mxu0
  %v1196 = vsel %vm775, %v933, 0
  %v1199 = vsel %vm775, %v935, 0
  %1201 = vmatprep.subr.mxu0 0.0
  %1202 = vmatpush1.msra.mxu0 %v52
  %1203 = vmatprep.subr.mxu0 0.0
  %1204 = vmatpush1.msra.mxu0 %v53
  %1205 = vmatprep.subr.mxu0 0.0
  %1206 = vmatpush1.msra.mxu0 0.0
  %1207 = vmatprep.subr.mxu0 0.0
  %1208 = vmatpush1.msra.mxu0 0.0
  %1209 = vmatprep.subr.mxu0 0.0
  %1210 = vmatpush1.msra.mxu0 0.0
  %1211 = vmatprep.subr.mxu0 0.0
  %1212 = vmatpush1.msra.mxu0 0.0
  %1213 = vmatprep.subr.mxu0 0.0
  %1214 = vmatpush1.msra.mxu0 0.0
  %1215 = vmatprep.subr.mxu0 0.0
  %1216 = vmatpush1.msra.mxu0 0.0
  %1217 = vmatprep.subr.mxu0 0.0
  %1218 = vmatpush1.msra.mxu0 0.0
  %1219 = vmatprep.subr.mxu0 0.0
  %1220 = vmatpush1.msra.mxu0 0.0
  %1221 = vmatprep.subr.mxu0 0.0
  %1222 = vmatpush1.msra.mxu0 0.0
  %1223 = vmatprep.subr.mxu0 0.0
  %1224 = vmatpush1.msra.mxu0 0.0
  %1225 = vmatprep.subr.mxu0 0.0
  %1226 = vmatpush1.msra.mxu0 0.0
  %1227 = vmatprep.subr.mxu0 0.0
  %1228 = vmatpush1.msra.mxu0 0.0
  %1229 = vmatprep.subr.mxu0 0.0
  %1230 = vmatpush1.msra.mxu0 0.0
  %1231 = vmatprep.subr.mxu0 0.0
  %1232 = vmatpush1.msra.mxu0 0.0
  %1233 = vmatprep.subr.mxu0 0.0
  %1234 = vmatpush1.msra.mxu0 0.0
  %1235 = vmatprep.subr.mxu0 0.0
  %1236 = vmatpush1.msra.mxu0 0.0
  %1237 = vmatprep.subr.mxu0 0.0
  %1238 = vmatpush1.msra.mxu0 0.0
  %1239 = vmatprep.subr.mxu0 0.0
  %1240 = vmatpush1.msra.mxu0 0.0
  %1241 = vmatprep.subr.mxu0 0.0
  %1242 = vmatpush1.msra.mxu0 0.0
  %1243 = vmatprep.subr.mxu0 0.0
  %1244 = vmatpush1.msra.mxu0 0.0
  %1245 = vmatprep.subr.mxu0 0.0
  %1246 = vmatpush1.msra.mxu0 0.0
  %1247 = vmatprep.subr.mxu0 0.0
  %1248 = vmatpush1.msra.mxu0 0.0
  %1249 = vmatprep.subr.mxu0 0.0
  %1250 = vmatpush1.msra.mxu0 0.0
  %1251 = vmatprep.subr.mxu0 0.0
  %1252 = vmatpush1.msra.mxu0 0.0
  %1253 = vmatprep.subr.mxu0 0.0
  %1254 = vmatpush1.msra.mxu0 0.0
  %1255 = vmatprep.subr.mxu0 0.0
  %1256 = vmatpush1.msra.mxu0 0.0
  %1257 = vmatprep.subr.mxu0 0.0
  %1258 = vmatpush1.msra.mxu0 0.0
  %1259 = vmatprep.subr.mxu0 0.0
  %1260 = vmatpush1.msra.mxu0 0.0
  %1261 = vmatprep.subr.mxu0 0.0
  %1262 = vmatpush1.msra.mxu0 0.0
  %1263 = vmatprep.subr.mxu0 0.0
  %1264 = vmatpush1.msra.mxu0 0.0
  %1265 = vmatprep.mubr.f32.mxu0 0.0
  %1266 = vmatmul.mubr.f32.gmra.mrb[0].mxu0 %v1196
  %v1267 = vpop.f32.mrb[0].mxu0
  %v1268 = vadd.f32 0.0, %v1267
  %v1269 = vpop.f32.mrb[0].mxu0
  %1270 = vmatprep.mubr.f32.mxu0 0.0
  %1271 = vmatmul.mubr.f32.gmra.mrb[0].mxu0 %v1199
  %v1272 = vpop.f32.mrb[0].mxu0
  %v1273 = vadd.f32 0.0, %v1272
  %v1274 = vpop.f32.mrb[0].mxu0
  %1275 = vdwg.mxu0
  %v1277 = vsel %vm775, %v937, 0
  %v1280 = vsel %vm775, %v939, 0
  %1282 = vmatprep.subr.mxu0 0.0
  %1283 = vmatpush1.msra.mxu0 %v54
  %1284 = vmatprep.subr.mxu0 0.0
  %1285 = vmatpush1.msra.mxu0 %v55
  %1286 = vmatprep.subr.mxu0 0.0
  %1287 = vmatpush1.msra.mxu0 0.0
  %1288 = vmatprep.subr.mxu0 0.0
  %1289 = vmatpush1.msra.mxu0 0.0
  %1290 = vmatprep.subr.mxu0 0.0
  %1291 = vmatpush1.msra.mxu0 0.0
  %1292 = vmatprep.subr.mxu0 0.0
  %1293 = vmatpush1.msra.mxu0 0.0
  %1294 = vmatprep.subr.mxu0 0.0
  %1295 = vmatpush1.msra.mxu0 0.0
  %1296 = vmatprep.subr.mxu0 0.0
  %1297 = vmatpush1.msra.mxu0 0.0
  %1298 = vmatprep.subr.mxu0 0.0
  %1299 = vmatpush1.msra.mxu0 0.0
  %1300 = vmatprep.subr.mxu0 0.0
  %1301 = vmatpush1.msra.mxu0 0.0
  %1302 = vmatprep.subr.mxu0 0.0
  %1303 = vmatpush1.msra.mxu0 0.0
  %1304 = vmatprep.subr.mxu0 0.0
  %1305 = vmatpush1.msra.mxu0 0.0
  %1306 = vmatprep.subr.mxu0 0.0
  %1307 = vmatpush1.msra.mxu0 0.0
  %1308 = vmatprep.subr.mxu0 0.0
  %1309 = vmatpush1.msra.mxu0 0.0
  %1310 = vmatprep.subr.mxu0 0.0
  %1311 = vmatpush1.msra.mxu0 0.0
  %1312 = vmatprep.subr.mxu0 0.0
  %1313 = vmatpush1.msra.mxu0 0.0
  %1314 = vmatprep.subr.mxu0 0.0
  %1315 = vmatpush1.msra.mxu0 0.0
  %1316 = vmatprep.subr.mxu0 0.0
  %1317 = vmatpush1.msra.mxu0 0.0
  %1318 = vmatprep.subr.mxu0 0.0
  %1319 = vmatpush1.msra.mxu0 0.0
  %1320 = vmatprep.subr.mxu0 0.0
  %1321 = vmatpush1.msra.mxu0 0.0
  %1322 = vmatprep.subr.mxu0 0.0
  %1323 = vmatpush1.msra.mxu0 0.0
  %1324 = vmatprep.subr.mxu0 0.0
  %1325 = vmatpush1.msra.mxu0 0.0
  %1326 = vmatprep.subr.mxu0 0.0
  %1327 = vmatpush1.msra.mxu0 0.0
  %1328 = vmatprep.subr.mxu0 0.0
  %1329 = vmatpush1.msra.mxu0 0.0
  %1330 = vmatprep.subr.mxu0 0.0
  %1331 = vmatpush1.msra.mxu0 0.0
  %1332 = vmatprep.subr.mxu0 0.0
  %1333 = vmatpush1.msra.mxu0 0.0
  %1334 = vmatprep.subr.mxu0 0.0
  %1335 = vmatpush1.msra.mxu0 0.0
  %1336 = vmatprep.subr.mxu0 0.0
  %1337 = vmatpush1.msra.mxu0 0.0
  %1338 = vmatprep.subr.mxu0 0.0
  %1339 = vmatpush1.msra.mxu0 0.0
  %1340 = vmatprep.subr.mxu0 0.0
  %1341 = vmatpush1.msra.mxu0 0.0
  %1342 = vmatprep.subr.mxu0 0.0
  %1343 = vmatpush1.msra.mxu0 0.0
  %1344 = vmatprep.subr.mxu0 0.0
  %1345 = vmatpush1.msra.mxu0 0.0
  %1346 = vmatprep.mubr.f32.mxu0 0.0
  %1347 = vmatmul.mubr.f32.gmra.mrb[0].mxu0 %v1277
  %v1348 = vpop.f32.mrb[0].mxu0
  %v1349 = vadd.f32 0.0, %v1348
  %v1350 = vpop.f32.mrb[0].mxu0
  %1351 = vmatprep.mubr.f32.mxu0 0.0
  %1352 = vmatmul.mubr.f32.gmra.mrb[0].mxu0 %v1280
  %v1353 = vpop.f32.mrb[0].mxu0
  %v1354 = vadd.f32 0.0, %v1353
  %v1355 = vpop.f32.mrb[0].mxu0
  %1356 = vdwg.mxu0
  %v1358 = vsel %vm775, %v941, 0
  %v1361 = vsel %vm775, %v943, 0
  %1363 = vmatprep.subr.mxu0 0.0
  %1364 = vmatpush1.msra.mxu0 %v56
  %1365 = vmatprep.subr.mxu0 0.0
  %1366 = vmatpush1.msra.mxu0 %v57
  %1367 = vmatprep.subr.mxu0 0.0
  %1368 = vmatpush1.msra.mxu0 0.0
  %1369 = vmatprep.subr.mxu0 0.0
  %1370 = vmatpush1.msra.mxu0 0.0
  %1371 = vmatprep.subr.mxu0 0.0
  %1372 = vmatpush1.msra.mxu0 0.0
  %1373 = vmatprep.subr.mxu0 0.0
  %1374 = vmatpush1.msra.mxu0 0.0
  %1375 = vmatprep.subr.mxu0 0.0
  %1376 = vmatpush1.msra.mxu0 0.0
  %1377 = vmatprep.subr.mxu0 0.0
  %1378 = vmatpush1.msra.mxu0 0.0
  %1379 = vmatprep.subr.mxu0 0.0
  %1380 = vmatpush1.msra.mxu0 0.0
  %1381 = vmatprep.subr.mxu0 0.0
  %1382 = vmatpush1.msra.mxu0 0.0
  %1383 = vmatprep.subr.mxu0 0.0
  %1384 = vmatpush1.msra.mxu0 0.0
  %1385 = vmatprep.subr.mxu0 0.0
  %1386 = vmatpush1.msra.mxu0 0.0
  %1387 = vmatprep.subr.mxu0 0.0
  %1388 = vmatpush1.msra.mxu0 0.0
  %1389 = vmatprep.subr.mxu0 0.0
  %1390 = vmatpush1.msra.mxu0 0.0
  %1391 = vmatprep.subr.mxu0 0.0
  %1392 = vmatpush1.msra.mxu0 0.0
  %1393 = vmatprep.subr.mxu0 0.0
  %1394 = vmatpush1.msra.mxu0 0.0
  %1395 = vmatprep.subr.mxu0 0.0
  %1396 = vmatpush1.msra.mxu0 0.0
  %1397 = vmatprep.subr.mxu0 0.0
  %1398 = vmatpush1.msra.mxu0 0.0
  %1399 = vmatprep.subr.mxu0 0.0
  %1400 = vmatpush1.msra.mxu0 0.0
  %1401 = vmatprep.subr.mxu0 0.0
  %1402 = vmatpush1.msra.mxu0 0.0
  %1403 = vmatprep.subr.mxu0 0.0
  %1404 = vmatpush1.msra.mxu0 0.0
  %1405 = vmatprep.subr.mxu0 0.0
  %1406 = vmatpush1.msra.mxu0 0.0
  %1407 = vmatprep.subr.mxu0 0.0
  %1408 = vmatpush1.msra.mxu0 0.0
  %1409 = vmatprep.subr.mxu0 0.0
  %1410 = vmatpush1.msra.mxu0 0.0
  %1411 = vmatprep.subr.mxu0 0.0
  %1412 = vmatpush1.msra.mxu0 0.0
  %1413 = vmatprep.subr.mxu0 0.0
  %1414 = vmatpush1.msra.mxu0 0.0
  %1415 = vmatprep.subr.mxu0 0.0
  %1416 = vmatpush1.msra.mxu0 0.0
  %1417 = vmatprep.subr.mxu0 0.0
  %1418 = vmatpush1.msra.mxu0 0.0
  %1419 = vmatprep.subr.mxu0 0.0
  %1420 = vmatpush1.msra.mxu0 0.0
  %1421 = vmatprep.subr.mxu0 0.0
  %1422 = vmatpush1.msra.mxu0 0.0
  %1423 = vmatprep.subr.mxu0 0.0
  %1424 = vmatpush1.msra.mxu0 0.0
  %1425 = vmatprep.subr.mxu0 0.0
  %1426 = vmatpush1.msra.mxu0 0.0
  %1427 = vmatprep.mubr.f32.mxu0 0.0
  %1428 = vmatmul.mubr.f32.gmra.mrb[0].mxu0 %v1358
  %v1429 = vpop.f32.mrb[0].mxu0
  %v1430 = vadd.f32 0.0, %v1429
  %v1431 = vpop.f32.mrb[0].mxu0
  %1432 = vmatprep.mubr.f32.mxu0 0.0
  %1433 = vmatmul.mubr.f32.gmra.mrb[0].mxu0 %v1361
  %v1434 = vpop.f32.mrb[0].mxu0
  %v1435 = vadd.f32 0.0, %v1434
  %v1436 = vpop.f32.mrb[0].mxu0
  %1437 = vdwg.mxu0
  %v1439 = vsel %vm775, %v945, 0
  %v1442 = vsel %vm775, %v947, 0
  %1444 = vmatprep.subr.mxu0 0.0
  %1445 = vmatpush1.msra.mxu0 %v58
  %1446 = vmatprep.subr.mxu0 0.0
  %1447 = vmatpush1.msra.mxu0 %v59
  %1448 = vmatprep.subr.mxu0 0.0
  %1449 = vmatpush1.msra.mxu0 0.0
  %1450 = vmatprep.subr.mxu0 0.0
  %1451 = vmatpush1.msra.mxu0 0.0
  %1452 = vmatprep.subr.mxu0 0.0
  %1453 = vmatpush1.msra.mxu0 0.0
  %1454 = vmatprep.subr.mxu0 0.0
  %1455 = vmatpush1.msra.mxu0 0.0
  %1456 = vmatprep.subr.mxu0 0.0
  %1457 = vmatpush1.msra.mxu0 0.0
  %1458 = vmatprep.subr.mxu0 0.0
  %1459 = vmatpush1.msra.mxu0 0.0
  %1460 = vmatprep.subr.mxu0 0.0
  %1461 = vmatpush1.msra.mxu0 0.0
  %1462 = vmatprep.subr.mxu0 0.0
  %1463 = vmatpush1.msra.mxu0 0.0
  %1464 = vmatprep.subr.mxu0 0.0
  %1465 = vmatpush1.msra.mxu0 0.0
  %1466 = vmatprep.subr.mxu0 0.0
  %1467 = vmatpush1.msra.mxu0 0.0
  %1468 = vmatprep.subr.mxu0 0.0
  %1469 = vmatpush1.msra.mxu0 0.0
  %1470 = vmatprep.subr.mxu0 0.0
  %1471 = vmatpush1.msra.mxu0 0.0
  %1472 = vmatprep.subr.mxu0 0.0
  %1473 = vmatpush1.msra.mxu0 0.0
  %1474 = vmatprep.subr.mxu0 0.0
  %1475 = vmatpush1.msra.mxu0 0.0
  %1476 = vmatprep.subr.mxu0 0.0
  %1477 = vmatpush1.msra.mxu0 0.0
  %1478 = vmatprep.subr.mxu0 0.0
  %1479 = vmatpush1.msra.mxu0 0.0
  %1480 = vmatprep.subr.mxu0 0.0
  %1481 = vmatpush1.msra.mxu0 0.0
  %1482 = vmatprep.subr.mxu0 0.0
  %1483 = vmatpush1.msra.mxu0 0.0
  %1484 = vmatprep.subr.mxu0 0.0
  %1485 = vmatpush1.msra.mxu0 0.0
  %1486 = vmatprep.subr.mxu0 0.0
  %1487 = vmatpush1.msra.mxu0 0.0
  %1488 = vmatprep.subr.mxu0 0.0
  %1489 = vmatpush1.msra.mxu0 0.0
  %1490 = vmatprep.subr.mxu0 0.0
  %1491 = vmatpush1.msra.mxu0 0.0
  %1492 = vmatprep.subr.mxu0 0.0
  %1493 = vmatpush1.msra.mxu0 0.0
  %1494 = vmatprep.subr.mxu0 0.0
  %1495 = vmatpush1.msra.mxu0 0.0
  %1496 = vmatprep.subr.mxu0 0.0
  %1497 = vmatpush1.msra.mxu0 0.0
  %1498 = vmatprep.subr.mxu0 0.0
  %1499 = vmatpush1.msra.mxu0 0.0
  %1500 = vmatprep.subr.mxu0 0.0
  %1501 = vmatpush1.msra.mxu0 0.0
  %1502 = vmatprep.subr.mxu0 0.0
  %1503 = vmatpush1.msra.mxu0 0.0
  %1504 = vmatprep.subr.mxu0 0.0
  %1505 = vmatpush1.msra.mxu0 0.0
  %1506 = vmatprep.subr.mxu0 0.0
  %1507 = vmatpush1.msra.mxu0 0.0
  %1508 = vmatprep.mubr.f32.mxu0 0.0
  %1509 = vmatmul.mubr.f32.gmra.mrb[0].mxu0 %v1439
  %v1510 = vpop.f32.mrb[0].mxu0
  %v1511 = vadd.f32 0.0, %v1510
  %v1512 = vpop.f32.mrb[0].mxu0
  %1513 = vmatprep.mubr.f32.mxu0 0.0
  %1514 = vmatmul.mubr.f32.gmra.mrb[0].mxu0 %v1442
  %v1515 = vpop.f32.mrb[0].mxu0
  %v1516 = vadd.f32 0.0, %v1515
  %v1517 = vpop.f32.mrb[0].mxu0
  %1518 = vdwg.mxu0
  %v1520 = vsel %vm775, %v949, 0
  %v1523 = vsel %vm775, %v951, 0
  %1525 = vmatprep.subr.mxu0 0.0
  %1526 = vmatpush1.msra.mxu0 %v60
  %1527 = vmatprep.subr.mxu0 0.0
  %1528 = vmatpush1.msra.mxu0 %v61
  %1529 = vmatprep.subr.mxu0 0.0
  %1530 = vmatpush1.msra.mxu0 0.0
  %1531 = vmatprep.subr.mxu0 0.0
  %1532 = vmatpush1.msra.mxu0 0.0
  %1533 = vmatprep.subr.mxu0 0.0
  %1534 = vmatpush1.msra.mxu0 0.0
  %1535 = vmatprep.subr.mxu0 0.0
  %1536 = vmatpush1.msra.mxu0 0.0
  %1537 = vmatprep.subr.mxu0 0.0
  %1538 = vmatpush1.msra.mxu0 0.0
  %1539 = vmatprep.subr.mxu0 0.0
  %1540 = vmatpush1.msra.mxu0 0.0
  %1541 = vmatprep.subr.mxu0 0.0
  %1542 = vmatpush1.msra.mxu0 0.0
  %1543 = vmatprep.subr.mxu0 0.0
  %1544 = vmatpush1.msra.mxu0 0.0
  %1545 = vmatprep.subr.mxu0 0.0
  %1546 = vmatpush1.msra.mxu0 0.0
  %1547 = vmatprep.subr.mxu0 0.0
  %1548 = vmatpush1.msra.mxu0 0.0
  %1549 = vmatprep.subr.mxu0 0.0
  %1550 = vmatpush1.msra.mxu0 0.0
  %1551 = vmatprep.subr.mxu0 0.0
  %1552 = vmatpush1.msra.mxu0 0.0
  %1553 = vmatprep.subr.mxu0 0.0
  %1554 = vmatpush1.msra.mxu0 0.0
  %1555 = vmatprep.subr.mxu0 0.0
  %1556 = vmatpush1.msra.mxu0 0.0
  %1557 = vmatprep.subr.mxu0 0.0
  %1558 = vmatpush1.msra.mxu0 0.0
  %1559 = vmatprep.subr.mxu0 0.0
  %1560 = vmatpush1.msra.mxu0 0.0
  %1561 = vmatprep.subr.mxu0 0.0
  %1562 = vmatpush1.msra.mxu0 0.0
  %1563 = vmatprep.subr.mxu0 0.0
  %1564 = vmatpush1.msra.mxu0 0.0
  %1565 = vmatprep.subr.mxu0 0.0
  %1566 = vmatpush1.msra.mxu0 0.0
  %1567 = vmatprep.subr.mxu0 0.0
  %1568 = vmatpush1.msra.mxu0 0.0
  %1569 = vmatprep.subr.mxu0 0.0
  %1570 = vmatpush1.msra.mxu0 0.0
  %1571 = vmatprep.subr.mxu0 0.0
  %1572 = vmatpush1.msra.mxu0 0.0
  %1573 = vmatprep.subr.mxu0 0.0
  %1574 = vmatpush1.msra.mxu0 0.0
  %1575 = vmatprep.subr.mxu0 0.0
  %1576 = vmatpush1.msra.mxu0 0.0
  %1577 = vmatprep.subr.mxu0 0.0
  %1578 = vmatpush1.msra.mxu0 0.0
  %1579 = vmatprep.subr.mxu0 0.0
  %1580 = vmatpush1.msra.mxu0 0.0
  %1581 = vmatprep.subr.mxu0 0.0
  %1582 = vmatpush1.msra.mxu0 0.0
  %1583 = vmatprep.subr.mxu0 0.0
  %1584 = vmatpush1.msra.mxu0 0.0
  %1585 = vmatprep.subr.mxu0 0.0
  %1586 = vmatpush1.msra.mxu0 0.0
  %1587 = vmatprep.subr.mxu0 0.0
  %1588 = vmatpush1.msra.mxu0 0.0
  %1589 = vmatprep.mubr.f32.mxu0 0.0
  %1590 = vmatmul.mubr.f32.gmra.mrb[0].mxu0 %v1520
  %v1591 = vpop.f32.mrb[0].mxu0
  %v1592 = vadd.f32 0.0, %v1591
  %v1593 = vpop.f32.mrb[0].mxu0
  %1594 = vmatprep.mubr.f32.mxu0 0.0
  %1595 = vmatmul.mubr.f32.gmra.mrb[0].mxu0 %v1523
  %v1596 = vpop.f32.mrb[0].mxu0
  %v1597 = vadd.f32 0.0, %v1596
  %v1598 = vpop.f32.mrb[0].mxu0
  %1599 = vdwg.mxu0
  %1600 = vst.msk [vmem:[%s3] sm:$0xff] %vm62, %v1025
  %1601 = vst.msk [vmem:[%s3 + $0x8] sm:$0xff] %vm62, %v1030
  %1602 = vst.msk [vmem:[%s3 + $0x10] sm:$0xff] %vm62, %v1106
  %1603 = vst.msk [vmem:[%s3 + $0x18] sm:$0xff] %vm62, %v1111
  %1604 = vst.msk [vmem:[%s3 + $0x20] sm:$0xff] %vm62, %v1187
  %1605 = vst.msk [vmem:[%s3 + $0x28] sm:$0xff] %vm62, %v1192
  %1606 = vst.msk [vmem:[%s3 + $0x30] sm:$0xff] %vm62, %v1268
  %1607 = vst.msk [vmem:[%s3 + $0x38] sm:$0xff] %vm62, %v1273
  %1608 = vst.msk [vmem:[%s3 + $0x40] sm:$0xff] %vm62, %v1349
  %1609 = vst.msk [vmem:[%s3 + $0x48] sm:$0xff] %vm62, %v1354
  %1610 = vst.msk [vmem:[%s3 + $0x50] sm:$0xff] %vm62, %v1430
  %1611 = vst.msk [vmem:[%s3 + $0x58] sm:$0xff] %vm62, %v1435
  %1612 = vst.msk [vmem:[%s3 + $0x60] sm:$0xff] %vm62, %v1511
  %1613 = vst.msk [vmem:[%s3 + $0x68] sm:$0xff] %vm62, %v1516
  %1614 = vst.msk [vmem:[%s3 + $0x70] sm:$0xff] %vm62, %v1592
  %1615 = vst.msk [vmem:[%s3 + $0x78] sm:$0xff] %vm62, %v1597
  // Predicated region
  $region14: #{encoder_forward.4} parent=0 // pred_check
    _
  $region15: #{encoder_forward.4} parent=0 // pred_check_branch
    %1617 = sbr.rel (0) target = $region17
  $region16: #{encoder_forward.4} parent=0 // pred_region
    _
  $region17: #{encoder_forward.4} parent=0 // pred_fallthru
    _
  // Predicated region
  $region18: #{encoder_forward.4} parent=0 // pred_check
    _
  $region19: #{encoder_forward.4} parent=0 // pred_check_branch
    %1619 = sbr.rel (0) target = $region21
  $region20: #{encoder_forward.4} parent=0 // pred_region
    _
  $region21: #{encoder_forward.4} parent=0 // pred_fallthru
    _

</llo_original>
